<compile_context>
chip_gen: v5e
topology: v5e:2x2
jax: 0.10.0
libtpu: 0.0.40
codegen_flags: <defaults>
</compile_context>

<pallas_src>
import functools

import jax
import jax.numpy as jnp
from jax import lax
from jax.experimental import pallas as pl
from jax.experimental.pallas import tpu as pltpu


def _expand_norm_kernel(x_ref, w_ref, sel_ref, selt_ref, gamma_ref, beta_ref,
                        o_ref, *, eps, inv_c):
    # x_ref: (tn, C); w_ref: (C, Cout); sel: (Cout, n_chunks); selt: (n_chunks, Cout)
    # gamma/beta: (1, Cout) (channel params tiled across chunks); o_ref: (tn, Cout)
    y = jnp.dot(x_ref[...], w_ref[...], preferred_element_type=jnp.float32)

    sel = sel_ref[...]
    # Per-chunk statistics on the MXU; keeps the hot data in full-width
    # (lane-dense) vregs instead of a (tn, n_chunks, C) reshape that would run
    # the VPU at C/128 lane utilization and force segmented XLU reductions.
    mean = jnp.dot(y, sel, preferred_element_type=jnp.float32) * inv_c
    ex2 = jnp.dot(y * y, sel, preferred_element_type=jnp.float32) * inv_c
    var = jnp.maximum(ex2 - mean * mean, 0.0)      # biased var (torch LayerNorm)
    inv = lax.rsqrt(var + eps)                     # EUP

    selt = selt_ref[...]
    mean_f = jnp.dot(mean, selt, preferred_element_type=jnp.float32)
    inv_f = jnp.dot(inv, selt, preferred_element_type=jnp.float32)

    o_ref[...] = ((y - mean_f) * inv_f * gamma_ref[...] + beta_ref[...]).astype(o_ref.dtype)


def _choose_row_tile(n_rows, per_row_bytes, const_bytes, budget_bytes):
    """Largest power-of-two row tile whose double-buffered blocks fit the VMEM budget."""
    tn = 8
    while tn < 4096 and const_bytes + (2 * tn) * per_row_bytes <= budget_bytes:
        tn *= 2
    # Keep >= ~4 grid steps when there is enough work (pipelining + v7x 2-TC sharding).
    while tn > 256 and pl.cdiv(n_rows, tn) < 4:
        tn //= 2
    return min(tn, max(8, ((n_rows + 7) // 8) * 8))


def final_patch_expand(x, w, gamma, beta, *, dim_scale=2, eps=1e-5,
                       compute_dtype=None, vmem_limit_bytes=32 * 1024 * 1024):
    """x: (B, D, H, W, C) -> (B, D*s, H*s, W*s, C)."""
    B, D, H, W, C = x.shape
    s = dim_scale
    n_chunks = s ** 3
    Cout = n_chunks * C
    assert w.shape == (C, Cout)

    N = B * D * H * W
    x2 = x.reshape(N, C)
    out_dtype = x.dtype

    # Optional bf16 operands: halves input HBM traffic (kernel is HBM-bound);
    # accumulation stays f32 via preferred_element_type.  Off by default so the
    # f32 PyTorch-module semantics (and the tight reference check) are kept.
    if compute_dtype is not None:
        x2 = x2.astype(compute_dtype)
        w = w.astype(compute_dtype)

    # Selector (block-indicator) matrices for the lane-dense per-chunk LayerNorm.
    chunk_of_col = jnp.arange(Cout, dtype=jnp.int32) // C
    sel = (chunk_of_col[:, None] == jnp.arange(n_chunks, dtype=jnp.int32)[None, :]
           ).astype(jnp.float32)                       # (Cout, n_chunks)
    selT = sel.T                                       # (n_chunks, Cout)
    gamma_t = jnp.tile(gamma.astype(jnp.float32).reshape(1, C), (1, n_chunks))
    beta_t = jnp.tile(beta.astype(jnp.float32).reshape(1, C), (1, n_chunks))

    in_b = jnp.dtype(x2.dtype).itemsize
    out_b = jnp.dtype(out_dtype).itemsize
    # Double-buffered x/out blocks + f32 intermediates per row of the tile.
    per_row = 2 * (C * in_b + Cout * out_b) + 2 * Cout * 4
    const_bytes = C * Cout * in_b + 2 * n_chunks * Cout * 4 + 2 * Cout * 4
    tn = _choose_row_tile(N, per_row, const_bytes, (vmem_limit_bytes * 3) // 4)
    grid = (pl.cdiv(N, tn),)      # ragged last block is handled (masked) by Pallas

    kernel = functools.partial(_expand_norm_kernel, eps=eps, inv_c=1.0 / C)

    cost = pl.CostEstimate(
        flops=2 * N * C * Cout + 4 * N * Cout * n_chunks + 6 * N * Cout,
        transcendentals=N * n_chunks,
        bytes_accessed=N * C * in_b + C * Cout * in_b + N * Cout * out_b,
    )

    def build(single_buffer_consts):
        def const_spec(shape):
            kw = {}
            if single_buffer_consts:
                # Constant-index operands are fetched once and never change:
                # a second pipeline buffer is pure VMEM waste.
                kw["pipeline_mode"] = pl.Buffered(1)
            return pl.BlockSpec(shape, lambda i: (0, 0), **kw)

        return pl.pallas_call(
            kernel,
            out_shape=jax.ShapeDtypeStruct((N, Cout), out_dtype),
            grid_spec=pltpu.PrefetchScalarGridSpec(
                num_scalar_prefetch=0,
                grid=grid,
                in_specs=[
                    pl.BlockSpec((tn, C), lambda i: (i, 0)),
                    const_spec((C, Cout)),
                    const_spec((Cout, n_chunks)),
                    const_spec((n_chunks, Cout)),
                    const_spec((1, Cout)),
                    const_spec((1, Cout)),
                ],
                out_specs=pl.BlockSpec((tn, Cout), lambda i: (i, 0)),
            ),
            compiler_params=pltpu.CompilerParams(
                dimension_semantics=("parallel",),
                vmem_limit_bytes=vmem_limit_bytes,
            ),
            cost_estimate=cost,
        )

    args = (x2, w, sel, selT, gamma_t, beta_t)
    try:
        y = build(True)(*args)
    except Exception:
        # Compatibility fallback for jax versions where BlockSpec.pipeline_mode
        # is not supported for pallas_call operands (default double-buffering).
        y = build(False)(*args)

    # rearrange 'b d h w (p1 p2 p3 c) -> b (d p1) (h p2) (w p3) c'.
    # Pure layout pass; XLA fuses the reshape+transpose into one copy.
    # TODO(synk): for C >= 128, scatter the (s,s,s,C) chunks straight from the
    # kernel into a (B,D,s,H,s,W,s,C) output to skip this extra HBM pass; at
    # C < 128 (this config) that would turn every store into masked vst.msk.
    y = y.reshape(B, D, H, W, s, s, s, C)
    y = jnp.transpose(y, (0, 1, 4, 2, 5, 3, 6, 7))
    return y.reshape(B, D * s, H * s, W * s, C)


def _reference(x, w, gamma, beta, *, dim_scale=2, eps=1e-5):
    B, D, H, W, C = x.shape
    s = dim_scale
    y = jnp.einsum("bdhwc,ce->bdhwe", x.astype(jnp.float32), w.astype(jnp.float32))
    y = y.reshape(B, D, H, W, s, s, s, C)
    y = jnp.transpose(y, (0, 1, 4, 2, 5, 3, 6, 7)).reshape(B, D * s, H * s, W * s, C)
    mean = jnp.mean(y, axis=-1, keepdims=True)
    var = jnp.mean((y - mean) ** 2, axis=-1, keepdims=True)
    y = (y - mean) * jax.lax.rsqrt(var + eps)
    return y * gamma + beta


if __name__ == "__main__":
    # Module config: input_resolution=(D,H,W)=(4,4,4), dim=32, dim_scale=2.
    B, D, H, W, dim = 2, 4, 4, 4, 32
    dim_scale = 2
    Cout = dim_scale ** 3 * dim

    key = jax.random.PRNGKey(0)
    kx, kw = jax.random.split(key)

    x = jax.random.normal(kx, (B, D, H, W, dim), dtype=jnp.float32)
    # nn.Linear(dim, 8*dim, bias=False): torch weight is (8*dim, dim); we store W^T (dim, 8*dim).
    w = jax.random.normal(kw, (dim, Cout), dtype=jnp.float32) / jnp.sqrt(dim)
    # nn.LayerNorm(dim) default init: gamma=1, beta=0.
    gamma = jnp.ones((dim,), dtype=jnp.float32)
    beta = jnp.zeros((dim,), dtype=jnp.float32)

    out = final_patch_expand(x, w, gamma, beta, dim_scale=dim_scale)
    out = jax.block_until_ready(out)
    assert out.shape == (B, D * dim_scale, H * dim_scale, W * dim_scale, dim), out.shape

    ref = _reference(x, w, gamma, beta, dim_scale=dim_scale)
    max_err = float(jnp.max(jnp.abs(out - ref)))
    assert jnp.allclose(out, ref, atol=5e-4, rtol=5e-4), max_err

    print("KERNEL_OK")
</pallas_src>

<mosaic_0001>
module attributes {stable_mosaic.version = 11 : i64} {
  func.func @_expand_norm_kernel(%arg0: i32, %arg1: memref<128x32xf32, #tpu.memory_space<vmem>>, %arg2: memref<32x256xf32, #tpu.memory_space<vmem>>, %arg3: memref<256x8xf32, #tpu.memory_space<vmem>>, %arg4: memref<8x256xf32, #tpu.memory_space<vmem>>, %arg5: memref<1x256xf32, #tpu.memory_space<vmem>>, %arg6: memref<1x256xf32, #tpu.memory_space<vmem>>, %arg7: memref<128x256xf32, #tpu.memory_space<vmem>>) attributes {dimension_semantics = [#tpu.dimension_semantics<parallel>], iteration_bounds = array<i64: 1>, scalar_prefetch = 0 : i64, scratch_operands = 0 : i64, tpu.core_type = #tpu.core_type<tc>, window_params = [{transform_indices = @transform_0, window_bounds = array<i64: 128, 32>}, {pipeline_mode = #tpu.pipeline_mode<synchronous>, transform_indices = @transform_1, window_bounds = array<i64: 32, 256>}, {pipeline_mode = #tpu.pipeline_mode<synchronous>, transform_indices = @transform_2, window_bounds = array<i64: 256, 8>}, {pipeline_mode = #tpu.pipeline_mode<synchronous>, transform_indices = @transform_3, window_bounds = array<i64: 8, 256>}, {pipeline_mode = #tpu.pipeline_mode<synchronous>, transform_indices = @transform_4, window_bounds = array<i64: 1, 256>}, {pipeline_mode = #tpu.pipeline_mode<synchronous>, transform_indices = @transform_5, window_bounds = array<i64: 1, 256>}, {transform_indices = @transform_6, window_bounds = array<i64: 128, 256>}]} {
    %c0 = arith.constant 0 : index
    %c0_0 = arith.constant 0 : index
    %0 = vector.load %arg1[%c0, %c0_0] : memref<128x32xf32, #tpu.memory_space<vmem>>, vector<128x32xf32>
    %c0_1 = arith.constant 0 : index
    %c0_2 = arith.constant 0 : index
    %1 = vector.load %arg2[%c0_1, %c0_2] : memref<32x256xf32, #tpu.memory_space<vmem>>, vector<32x256xf32>
    %cst = arith.constant dense<0.000000e+00> : vector<128x256xf32>
    %2 = tpu.matmul %0, %1, %cst {dimension_numbers = #tpu.dot_dimension_numbers<[1], [0], [0], [1], [0, 0, 1, 1], [], []>} : vector<128x32xf32>, vector<32x256xf32>, vector<128x256xf32> -> vector<128x256xf32>
    %c0_3 = arith.constant 0 : index
    %c0_4 = arith.constant 0 : index
    %3 = vector.load %arg3[%c0_3, %c0_4] : memref<256x8xf32, #tpu.memory_space<vmem>>, vector<256x8xf32>
    %cst_5 = arith.constant dense<0.000000e+00> : vector<128x8xf32>
    %4 = tpu.matmul %2, %3, %cst_5 {dimension_numbers = #tpu.dot_dimension_numbers<[1], [0], [0], [1], [0, 0, 1, 1], [], []>} : vector<128x256xf32>, vector<256x8xf32>, vector<128x8xf32> -> vector<128x8xf32>
    %cst_6 = arith.constant 3.125000e-02 : f32
    %5 = vector.broadcast %cst_6 : f32 to vector<128x8xf32>
    %6 = arith.mulf %4, %5 : vector<128x8xf32>
    %7 = arith.mulf %2, %2 : vector<128x256xf32>
    %cst_7 = arith.constant dense<0.000000e+00> : vector<128x8xf32>
    %8 = tpu.matmul %7, %3, %cst_7 {dimension_numbers = #tpu.dot_dimension_numbers<[1], [0], [0], [1], [0, 0, 1, 1], [], []>} : vector<128x256xf32>, vector<256x8xf32>, vector<128x8xf32> -> vector<128x8xf32>
    %cst_8 = arith.constant 3.125000e-02 : f32
    %9 = vector.broadcast %cst_8 : f32 to vector<128x8xf32>
    %10 = arith.mulf %8, %9 : vector<128x8xf32>
    %11 = arith.mulf %6, %6 : vector<128x8xf32>
    %12 = arith.subf %10, %11 : vector<128x8xf32>
    %cst_9 = arith.constant 0.000000e+00 : f32
    %13 = vector.broadcast %cst_9 : f32 to vector<128x8xf32>
    %14 = arith.maximumf %12, %13 : vector<128x8xf32>
    %cst_10 = arith.constant 9.99999974E-6 : f32
    %15 = vector.broadcast %cst_10 : f32 to vector<128x8xf32>
    %16 = arith.addf %14, %15 : vector<128x8xf32>
    %17 = math.rsqrt %16 : vector<128x8xf32>
    %c0_11 = arith.constant 0 : index
    %c0_12 = arith.constant 0 : index
    %18 = vector.load %arg4[%c0_11, %c0_12] : memref<8x256xf32, #tpu.memory_space<vmem>>, vector<8x256xf32>
    %cst_13 = arith.constant dense<0.000000e+00> : vector<128x256xf32>
    %19 = tpu.matmul %6, %18, %cst_13 {dimension_numbers = #tpu.dot_dimension_numbers<[1], [0], [0], [1], [0, 0, 1, 1], [], []>} : vector<128x8xf32>, vector<8x256xf32>, vector<128x256xf32> -> vector<128x256xf32>
    %cst_14 = arith.constant dense<0.000000e+00> : vector<128x256xf32>
    %20 = tpu.matmul %17, %18, %cst_14 {dimension_numbers = #tpu.dot_dimension_numbers<[1], [0], [0], [1], [0, 0, 1, 1], [], []>} : vector<128x8xf32>, vector<8x256xf32>, vector<128x256xf32> -> vector<128x256xf32>
    %21 = arith.subf %2, %19 : vector<128x256xf32>
    %22 = arith.mulf %21, %20 : vector<128x256xf32>
    %c0_15 = arith.constant 0 : index
    %c0_16 = arith.constant 0 : index
    %23 = vector.load %arg5[%c0_15, %c0_16] : memref<1x256xf32, #tpu.memory_space<vmem>>, vector<1x256xf32>
    %24 = vector.broadcast %23 : vector<1x256xf32> to vector<128x256xf32>
    %25 = arith.mulf %22, %24 : vector<128x256xf32>
    %c0_17 = arith.constant 0 : index
    %c0_18 = arith.constant 0 : index
    %26 = vector.load %arg6[%c0_17, %c0_18] : memref<1x256xf32, #tpu.memory_space<vmem>>, vector<1x256xf32>
    %27 = vector.broadcast %26 : vector<1x256xf32> to vector<128x256xf32>
    %28 = arith.addf %25, %27 : vector<128x256xf32>
    %c0_19 = arith.constant 0 : index
    %c0_20 = arith.constant 0 : index
    %29 = vector.load %arg7[%c0_19, %c0_20] : memref<128x256xf32, #tpu.memory_space<vmem>>, vector<128x256xf32>
    tpu.vector_store %arg7[%c0_19, %c0_20], %28 {strides = array<i32>} : memref<128x256xf32, #tpu.memory_space<vmem>>, vector<128x256xf32>,
    return
  }
  func.func @transform_0(%arg0: i32) -> (i32, i32) {
    %c0_i32 = arith.constant 0 : i32
    %c0_i32_0 = arith.constant 0 : i32
    return %arg0, %c0_i32 : i32, i32
  }
  func.func @transform_1(%arg0: i32) -> (i32, i32) {
    %c0_i32 = arith.constant 0 : i32
    %c0_i32_0 = arith.constant 0 : i32
    %c0_i32_1 = arith.constant 0 : i32
    return %c0_i32, %c0_i32_0 : i32, i32
  }
  func.func @transform_2(%arg0: i32) -> (i32, i32) {
    %c0_i32 = arith.constant 0 : i32
    %c0_i32_0 = arith.constant 0 : i32
    %c0_i32_1 = arith.constant 0 : i32
    return %c0_i32, %c0_i32_0 : i32, i32
  }
  func.func @transform_3(%arg0: i32) -> (i32, i32) {
    %c0_i32 = arith.constant 0 : i32
    %c0_i32_0 = arith.constant 0 : i32
    %c0_i32_1 = arith.constant 0 : i32
    return %c0_i32, %c0_i32_0 : i32, i32
  }
  func.func @transform_4(%arg0: i32) -> (i32, i32) {
    %c0_i32 = arith.constant 0 : i32
    %c0_i32_0 = arith.constant 0 : i32
    %c0_i32_1 = arith.constant 0 : i32
    return %c0_i32, %c0_i32_0 : i32, i32
  }
  func.func @transform_5(%arg0: i32) -> (i32, i32) {
    %c0_i32 = arith.constant 0 : i32
    %c0_i32_0 = arith.constant 0 : i32
    %c0_i32_1 = arith.constant 0 : i32
    return %c0_i32, %c0_i32_0 : i32, i32
  }
  func.func @transform_6(%arg0: i32) -> (i32, i32) {
    %c0_i32 = arith.constant 0 : i32
    %c0_i32_0 = arith.constant 0 : i32
    return %arg0, %c0_i32 : i32, i32
  }
}

module attributes {stable_mosaic.version = 11 : i64} {
  func.func @_expand_norm_kernel(%arg0: i32, %arg1: memref<128x32xf32, #tpu.memory_space<vmem>>, %arg2: memref<32x256xf32, #tpu.memory_space<vmem>>, %arg3: memref<256x8xf32, #tpu.memory_space<vmem>>, %arg4: memref<8x256xf32, #tpu.memory_space<vmem>>, %arg5: memref<1x256xf32, #tpu.memory_space<vmem>>, %arg6: memref<1x256xf32, #tpu.memory_space<vmem>>, %arg7: memref<128x256xf32, #tpu.memory_space<vmem>>) attributes {dimension_semantics = [#tpu.dimension_semantics<parallel>], iteration_bounds = array<i64: 1>, scalar_prefetch = 0 : i64, scratch_operands = 0 : i64, tpu.core_type = #tpu.core_type<tc>, window_params = [{transform_indices = @transform_0, window_bounds = array<i64: 128, 32>}, {pipeline_mode = #tpu.pipeline_mode<synchronous>, transform_indices = @transform_1, window_bounds = array<i64: 32, 256>}, {pipeline_mode = #tpu.pipeline_mode<synchronous>, transform_indices = @transform_2, window_bounds = array<i64: 256, 8>}, {pipeline_mode = #tpu.pipeline_mode<synchronous>, transform_indices = @transform_3, window_bounds = array<i64: 8, 256>}, {pipeline_mode = #tpu.pipeline_mode<synchronous>, transform_indices = @transform_4, window_bounds = array<i64: 1, 256>}, {pipeline_mode = #tpu.pipeline_mode<synchronous>, transform_indices = @transform_5, window_bounds = array<i64: 1, 256>}, {transform_indices = @transform_6, window_bounds = array<i64: 128, 256>}]} {
    %c0 = arith.constant 0 : index
    %c0_0 = arith.constant 0 : index
    %0 = vector.load %arg1[%c0, %c0_0] : memref<128x32xf32, #tpu.memory_space<vmem>>, vector<128x32xf32>
    %c0_1 = arith.constant 0 : index
    %c0_2 = arith.constant 0 : index
    %1 = vector.load %arg2[%c0_1, %c0_2] : memref<32x256xf32, #tpu.memory_space<vmem>>, vector<32x256xf32>
    %cst = arith.constant dense<0.000000e+00> : vector<128x256xf32>
    %2 = tpu.matmul %0, %1, %cst {dimension_numbers = #tpu.dot_dimension_numbers<[1], [0], [0], [1], [0, 0, 1, 1], [], []>} : vector<128x32xf32>, vector<32x256xf32>, vector<128x256xf32> -> vector<128x256xf32>
    %c0_3 = arith.constant 0 : index
    %c0_4 = arith.constant 0 : index
    %3 = vector.load %arg3[%c0_3, %c0_4] : memref<256x8xf32, #tpu.memory_space<vmem>>, vector<256x8xf32>
    %cst_5 = arith.constant dense<0.000000e+00> : vector<128x8xf32>
    %4 = tpu.matmul %2, %3, %cst_5 {dimension_numbers = #tpu.dot_dimension_numbers<[1], [0], [0], [1], [0, 0, 1, 1], [], []>} : vector<128x256xf32>, vector<256x8xf32>, vector<128x8xf32> -> vector<128x8xf32>
    %cst_6 = arith.constant 3.125000e-02 : f32
    %5 = vector.broadcast %cst_6 : f32 to vector<128x8xf32>
    %6 = arith.mulf %4, %5 : vector<128x8xf32>
    %7 = arith.mulf %2, %2 : vector<128x256xf32>
    %cst_7 = arith.constant dense<0.000000e+00> : vector<128x8xf32>
    %8 = tpu.matmul %7, %3, %cst_7 {dimension_numbers = #tpu.dot_dimension_numbers<[1], [0], [0], [1], [0, 0, 1, 1], [], []>} : vector<128x256xf32>, vector<256x8xf32>, vector<128x8xf32> -> vector<128x8xf32>
    %cst_8 = arith.constant 3.125000e-02 : f32
    %9 = vector.broadcast %cst_8 : f32 to vector<128x8xf32>
    %10 = arith.mulf %8, %9 : vector<128x8xf32>
    %11 = arith.mulf %6, %6 : vector<128x8xf32>
    %12 = arith.subf %10, %11 : vector<128x8xf32>
    %cst_9 = arith.constant 0.000000e+00 : f32
    %13 = vector.broadcast %cst_9 : f32 to vector<128x8xf32>
    %14 = arith.maximumf %12, %13 : vector<128x8xf32>
    %cst_10 = arith.constant 9.99999974E-6 : f32
    %15 = vector.broadcast %cst_10 : f32 to vector<128x8xf32>
    %16 = arith.addf %14, %15 : vector<128x8xf32>
    %17 = math.rsqrt %16 : vector<128x8xf32>
    %c0_11 = arith.constant 0 : index
    %c0_12 = arith.constant 0 : index
    %18 = vector.load %arg4[%c0_11, %c0_12] : memref<8x256xf32, #tpu.memory_space<vmem>>, vector<8x256xf32>
    %cst_13 = arith.constant dense<0.000000e+00> : vector<128x256xf32>
    %19 = tpu.matmul %6, %18, %cst_13 {dimension_numbers = #tpu.dot_dimension_numbers<[1], [0], [0], [1], [0, 0, 1, 1], [], []>} : vector<128x8xf32>, vector<8x256xf32>, vector<128x256xf32> -> vector<128x256xf32>
    %cst_14 = arith.constant dense<0.000000e+00> : vector<128x256xf32>
    %20 = tpu.matmul %17, %18, %cst_14 {dimension_numbers = #tpu.dot_dimension_numbers<[1], [0], [0], [1], [0, 0, 1, 1], [], []>} : vector<128x8xf32>, vector<8x256xf32>, vector<128x256xf32> -> vector<128x256xf32>
    %21 = arith.subf %2, %19 : vector<128x256xf32>
    %22 = arith.mulf %21, %20 : vector<128x256xf32>
    %c0_15 = arith.constant 0 : index
    %c0_16 = arith.constant 0 : index
    %23 = vector.load %arg5[%c0_15, %c0_16] : memref<1x256xf32, #tpu.memory_space<vmem>>, vector<1x256xf32>
    %24 = vector.broadcast %23 : vector<1x256xf32> to vector<128x256xf32>
    %25 = arith.mulf %22, %24 : vector<128x256xf32>
    %c0_17 = arith.constant 0 : index
    %c0_18 = arith.constant 0 : index
    %26 = vector.load %arg6[%c0_17, %c0_18] : memref<1x256xf32, #tpu.memory_space<vmem>>, vector<1x256xf32>
    %27 = vector.broadcast %26 : vector<1x256xf32> to vector<128x256xf32>
    %28 = arith.addf %25, %27 : vector<128x256xf32>
    %c0_19 = arith.constant 0 : index
    %c0_20 = arith.constant 0 : index
    %29 = vector.load %arg7[%c0_19, %c0_20] : memref<128x256xf32, #tpu.memory_space<vmem>>, vector<128x256xf32>
    tpu.vector_store %arg7[%c0_19, %c0_20], %28 {strides = array<i32>} : memref<128x256xf32, #tpu.memory_space<vmem>>, vector<128x256xf32>,
    return
  }
  func.func @transform_0(%arg0: i32) -> (i32, i32) {
    %c0_i32 = arith.constant 0 : i32
    %c0_i32_0 = arith.constant 0 : i32
    return %arg0, %c0_i32 : i32, i32
  }
  func.func @transform_1(%arg0: i32) -> (i32, i32) {
    %c0_i32 = arith.constant 0 : i32
    %c0_i32_0 = arith.constant 0 : i32
    %c0_i32_1 = arith.constant 0 : i32
    return %c0_i32, %c0_i32_0 : i32, i32
  }
  func.func @transform_2(%arg0: i32) -> (i32, i32) {
    %c0_i32 = arith.constant 0 : i32
    %c0_i32_0 = arith.constant 0 : i32
    %c0_i32_1 = arith.constant 0 : i32
    return %c0_i32, %c0_i32_0 : i32, i32
  }
  func.func @transform_3(%arg0: i32) -> (i32, i32) {
    %c0_i32 = arith.constant 0 : i32
    %c0_i32_0 = arith.constant 0 : i32
    %c0_i32_1 = arith.constant 0 : i32
    return %c0_i32, %c0_i32_0 : i32, i32
  }
  func.func @transform_4(%arg0: i32) -> (i32, i32) {
    %c0_i32 = arith.constant 0 : i32
    %c0_i32_0 = arith.constant 0 : i32
    %c0_i32_1 = arith.constant 0 : i32
    return %c0_i32, %c0_i32_0 : i32, i32
  }
  func.func @transform_5(%arg0: i32) -> (i32, i32) {
    %c0_i32 = arith.constant 0 : i32
    %c0_i32_0 = arith.constant 0 : i32
    %c0_i32_1 = arith.constant 0 : i32
    return %c0_i32, %c0_i32_0 : i32, i32
  }
  func.func @transform_6(%arg0: i32) -> (i32, i32) {
    %c0_i32 = arith.constant 0 : i32
    %c0_i32_0 = arith.constant 0 : i32
    return %arg0, %c0_i32 : i32, i32
  }
}

</mosaic_0001>

<llo_original>
// kernel: tpu_custom_call.1
$region0: #{tpu_custom_call.1}
  #allocation0 [shape = 'u32[]', space=smem, size = 0x4, offset = 0x4, fixed_abs, tag = 'smem constant byte address 0x4 - core index']
  #allocation1 [shape = 'u32[72,128]{1,0:T(1,128)}', space=vmem, size = 0x9000, scoped, tag = 'internal scratch']
  %s0 = inlined_call_operand.vmem [shape: f32[128,32], index: 0, kind: input, shape index: {}]
  %s1 = inlined_call_operand.vmem [shape: f32[32,256], index: 1, kind: input, shape index: {}]
  %s2 = inlined_call_operand.vmem [shape: f32[256,8], index: 2, kind: input, shape index: {}]
  %s3 = inlined_call_operand.vmem [shape: f32[8,256], index: 3, kind: input, shape index: {}]
  %s4 = inlined_call_operand.vmem [shape: f32[1,256], index: 4, kind: input, shape index: {}]
  %s5 = inlined_call_operand.vmem [shape: f32[1,256], index: 5, kind: input, shape index: {}]
  %s6 = inlined_call_operand.hbm [shape: f32[128,256], index: 6, kind: output, shape index: {}]
  %s7 = sld [smem:[#allocation0]]
  $region34: #{tpu_custom_call.1} parent=0
    _
  %s9 = ssub.s32 1, %s7
  %s10 = scalar_select 0, %s9, %s7
  $region1: #{tpu_custom_call.1} parent=0
    #allocation2 [shape = 'u8[131072]{0}', space=vmem, size = 0x20000, scoped, tag = 'output window, operand 0, single buffered']
    #allocation3 [shape = 's32[1]{0}', space=sflag, size = 0x4, scoped, tag = 'scoped memory for tpu_custom_call.1']
    %11 = vsyncpa [#allocation3], 0
    // Predicated region
    $region2: #{tpu_custom_call.1} parent=1 // pred_check
      _
    $region3: #{tpu_custom_call.1} parent=1 // pred_check_branch
      %13 = sbr.rel (0) target = $region5
    $region4: #{tpu_custom_call.1} parent=1 // pred_region
      _
    $region5: #{tpu_custom_call.1} parent=1 // pred_fallthru
      _
    // Predicated region
    $region6: #{tpu_custom_call.1} parent=1 // pred_check
      _
    $region7: #{tpu_custom_call.1} parent=1 // pred_check_branch
      %15 = sbr.rel (0) target = $region9
    $region8: #{tpu_custom_call.1} parent=1 // pred_region
      _
    $region9: #{tpu_custom_call.1} parent=1 // pred_fallthru
      _
    // Predicated region
    $region10: #{tpu_custom_call.1} parent=1 // pred_check
      _
    $region11: #{tpu_custom_call.1} parent=1 // pred_check_branch
      %17 = sbr.rel (0) target = $region13
    $region12: #{tpu_custom_call.1} parent=1 // pred_region
      _
    $region13: #{tpu_custom_call.1} parent=1 // pred_fallthru
      _
    // Predicated region
    $region14: #{tpu_custom_call.1} parent=1 // pred_check
      _
    $region15: #{tpu_custom_call.1} parent=1 // pred_check_branch
      %19 = sbr.rel (0) target = $region17
    $region16: #{tpu_custom_call.1} parent=1 // pred_region
      _
    $region17: #{tpu_custom_call.1} parent=1 // pred_fallthru
      _
    // Predicated region
    $region18: #{tpu_custom_call.1} parent=1 // pred_check
      _
    $region19: #{tpu_custom_call.1} parent=1 // pred_check_branch
      %21 = sbr.rel (0) target = $region21
    $region20: #{tpu_custom_call.1} parent=1 // pred_region
      _
    $region21: #{tpu_custom_call.1} parent=1 // pred_fallthru
      _
    // Predicated region
    $region22: #{tpu_custom_call.1} parent=1 // pred_check
      _
    $region23: #{tpu_custom_call.1} parent=1 // pred_check_branch
      %23 = sbr.rel (0) target = $region25
    $region24: #{tpu_custom_call.1} parent=1 // pred_region
      _
    $region25: #{tpu_custom_call.1} parent=1 // pred_fallthru
      _
    %v24 = vld [vmem:[%s0] sm:$0xff]
    %v25 = vld [vmem:[%s0 + $0x8] sm:$0xff]
    %v26 = vld [vmem:[%s0 + $0x10] sm:$0xff]
    %v27 = vld [vmem:[%s0 + $0x18] sm:$0xff]
    %v28 = vld [vmem:[%s0 + $0x20] sm:$0xff]
    %v29 = vld [vmem:[%s0 + $0x28] sm:$0xff]
    %v30 = vld [vmem:[%s0 + $0x30] sm:$0xff]
    %v31 = vld [vmem:[%s0 + $0x38] sm:$0xff]
    %v32 = vld [vmem:[%s0 + $0x40] sm:$0xff]
    %v33 = vld [vmem:[%s0 + $0x48] sm:$0xff]
    %v34 = vld [vmem:[%s0 + $0x50] sm:$0xff]
    %v35 = vld [vmem:[%s0 + $0x58] sm:$0xff]
    %v36 = vld [vmem:[%s0 + $0x60] sm:$0xff]
    %v37 = vld [vmem:[%s0 + $0x68] sm:$0xff]
    %v38 = vld [vmem:[%s0 + $0x70] sm:$0xff]
    %v39 = vld [vmem:[%s0 + $0x78] sm:$0xff]
    %v40 = vld [vmem:[%s1] sm:$0xff]
    %v41 = vld [vmem:[%s1 + $0x8] sm:$0xff]
    %v42 = vld [vmem:[%s1 + $0x10] sm:$0xff]
    %v43 = vld [vmem:[%s1 + $0x18] sm:$0xff]
    %v44 = vld [vmem:[%s1 + $0x20] sm:$0xff]
    %v45 = vld [vmem:[%s1 + $0x28] sm:$0xff]
    %v46 = vld [vmem:[%s1 + $0x30] sm:$0xff]
    %v47 = vld [vmem:[%s1 + $0x38] sm:$0xff]
    %vm48 = vcmask 261120
    %v50 = vsel %vm48, %v24, 0
    %v53 = vsel %vm48, %v25, 0
    %v56 = vsel %vm48, %v26, 0
    %v59 = vsel %vm48, %v27, 0
    %v62 = vsel %vm48, %v28, 0
    %v65 = vsel %vm48, %v29, 0
    %v68 = vsel %vm48, %v30, 0
    %v71 = vsel %vm48, %v31, 0
    %v74 = vsel %vm48, %v32, 0
    %v77 = vsel %vm48, %v33, 0
    %v80 = vsel %vm48, %v34, 0
    %v83 = vsel %vm48, %v35, 0
    %v86 = vsel %vm48, %v36, 0
    %v89 = vsel %vm48, %v37, 0
    %v92 = vsel %vm48, %v38, 0
    %v95 = vsel %vm48, %v39, 0
    %97 = vmatpush.msra.mxu0 0.0
    %98 = vmatpush.msra.mxu0 0.0
    %99 = vmatpush.msra.mxu0 0.0
    %100 = vmatpush.msra.mxu0 0.0
    %101 = vmatpush.msra.mxu0 0.0
    %102 = vmatpush.msra.mxu0 0.0
    %103 = vmatpush.msra.mxu0 0.0
    %104 = vmatpush.msra.mxu0 0.0
    %105 = vmatpush.msra.mxu0 0.0
    %106 = vmatpush.msra.mxu0 0.0
    %107 = vmatpush.msra.mxu0 0.0
    %108 = vmatpush.msra.mxu0 0.0
    %109 = vmatpush.msra.mxu0 %v46
    %110 = vmatpush.msra.mxu0 %v44
    %111 = vmatpush.msra.mxu0 %v42
    %112 = vmatpush.msra.mxu0 %v40
    %113 = vmatmul.f32.gmra.mxu0 %v50
    %v114 = vpop.f32.mrf.mxu0
    %v115 = vadd.f32 0.0, %v114
    %116 = vmatmul.f32.gmra.mxu0 %v53
    %v117 = vpop.f32.mrf.mxu0
    %v118 = vadd.f32 0.0, %v117
    %119 = vmatmul.f32.gmra.mxu0 %v56
    %v120 = vpop.f32.mrf.mxu0
    %v121 = vadd.f32 0.0, %v120
    %122 = vmatmul.f32.gmra.mxu0 %v59
    %v123 = vpop.f32.mrf.mxu0
    %v124 = vadd.f32 0.0, %v123
    %125 = vmatmul.f32.gmra.mxu0 %v62
    %v126 = vpop.f32.mrf.mxu0
    %v127 = vadd.f32 0.0, %v126
    %128 = vmatmul.f32.gmra.mxu0 %v65
    %v129 = vpop.f32.mrf.mxu0
    %v130 = vadd.f32 0.0, %v129
    %131 = vmatmul.f32.gmra.mxu0 %v68
    %v132 = vpop.f32.mrf.mxu0
    %v133 = vadd.f32 0.0, %v132
    %134 = vmatmul.f32.gmra.mxu0 %v71
    %v135 = vpop.f32.mrf.mxu0
    %v136 = vadd.f32 0.0, %v135
    %137 = vmatmul.f32.gmra.mxu0 %v74
    %v138 = vpop.f32.mrf.mxu0
    %v139 = vadd.f32 0.0, %v138
    %140 = vmatmul.f32.gmra.mxu0 %v77
    %v141 = vpop.f32.mrf.mxu0
    %v142 = vadd.f32 0.0, %v141
    %143 = vmatmul.f32.gmra.mxu0 %v80
    %v144 = vpop.f32.mrf.mxu0
    %v145 = vadd.f32 0.0, %v144
    %146 = vmatmul.f32.gmra.mxu0 %v83
    %v147 = vpop.f32.mrf.mxu0
    %v148 = vadd.f32 0.0, %v147
    %149 = vmatmul.f32.gmra.mxu0 %v86
    %v150 = vpop.f32.mrf.mxu0
    %v151 = vadd.f32 0.0, %v150
    %152 = vmatmul.f32.gmra.mxu0 %v89
    %v153 = vpop.f32.mrf.mxu0
    %v154 = vadd.f32 0.0, %v153
    %155 = vmatmul.f32.gmra.mxu0 %v92
    %v156 = vpop.f32.mrf.mxu0
    %v157 = vadd.f32 0.0, %v156
    %158 = vmatmul.f32.gmra.mxu0 %v95
    %v159 = vpop.f32.mrf.mxu0
    %v160 = vadd.f32 0.0, %v159
    %161 = vdwg.mxu0
    %162 = vmatpush.msra.mxu0 0.0
    %163 = vmatpush.msra.mxu0 0.0
    %164 = vmatpush.msra.mxu0 0.0
    %165 = vmatpush.msra.mxu0 0.0
    %166 = vmatpush.msra.mxu0 0.0
    %167 = vmatpush.msra.mxu0 0.0
    %168 = vmatpush.msra.mxu0 0.0
    %169 = vmatpush.msra.mxu0 0.0
    %170 = vmatpush.msra.mxu0 0.0
    %171 = vmatpush.msra.mxu0 0.0
    %172 = vmatpush.msra.mxu0 0.0
    %173 = vmatpush.msra.mxu0 0.0
    %174 = vmatpush.msra.mxu0 %v47
    %175 = vmatpush.msra.mxu0 %v45
    %176 = vmatpush.msra.mxu0 %v43
    %177 = vmatpush.msra.mxu0 %v41
    %178 = vmatmul.f32.gmra.mxu0 %v50
    %v179 = vpop.f32.mrf.mxu0
    %v180 = vadd.f32 0.0, %v179
    %181 = vmatmul.f32.gmra.mxu0 %v53
    %v182 = vpop.f32.mrf.mxu0
    %v183 = vadd.f32 0.0, %v182
    %184 = vmatmul.f32.gmra.mxu0 %v56
    %v185 = vpop.f32.mrf.mxu0
    %v186 = vadd.f32 0.0, %v185
    %187 = vmatmul.f32.gmra.mxu0 %v59
    %v188 = vpop.f32.mrf.mxu0
    %v189 = vadd.f32 0.0, %v188
    %190 = vmatmul.f32.gmra.mxu0 %v62
    %v191 = vpop.f32.mrf.mxu0
    %v192 = vadd.f32 0.0, %v191
    %193 = vmatmul.f32.gmra.mxu0 %v65
    %v194 = vpop.f32.mrf.mxu0
    %v195 = vadd.f32 0.0, %v194
    %196 = vmatmul.f32.gmra.mxu0 %v68
    %v197 = vpop.f32.mrf.mxu0
    %v198 = vadd.f32 0.0, %v197
    %199 = vmatmul.f32.gmra.mxu0 %v71
    %v200 = vpop.f32.mrf.mxu0
    %v201 = vadd.f32 0.0, %v200
    %202 = vmatmul.f32.gmra.mxu0 %v74
    %v203 = vpop.f32.mrf.mxu0
    %v204 = vadd.f32 0.0, %v203
    %205 = vmatmul.f32.gmra.mxu0 %v77
    %v206 = vpop.f32.mrf.mxu0
    %v207 = vadd.f32 0.0, %v206
    %208 = vmatmul.f32.gmra.mxu0 %v80
    %v209 = vpop.f32.mrf.mxu0
    %v210 = vadd.f32 0.0, %v209
    %211 = vmatmul.f32.gmra.mxu0 %v83
    %v212 = vpop.f32.mrf.mxu0
    %v213 = vadd.f32 0.0, %v212
    %214 = vmatmul.f32.gmra.mxu0 %v86
    %v215 = vpop.f32.mrf.mxu0
    %v216 = vadd.f32 0.0, %v215
    %217 = vmatmul.f32.gmra.mxu0 %v89
    %v218 = vpop.f32.mrf.mxu0
    %v219 = vadd.f32 0.0, %v218
    %220 = vmatmul.f32.gmra.mxu0 %v92
    %v221 = vpop.f32.mrf.mxu0
    %v222 = vadd.f32 0.0, %v221
    %223 = vmatmul.f32.gmra.mxu0 %v95
    %v224 = vpop.f32.mrf.mxu0
    %v225 = vadd.f32 0.0, %v224
    %226 = vdwg.mxu0
    %v227 = vld [vmem:[%s2] sm:$0xff]
    %v228 = vld [vmem:[%s2 + $0x8] sm:$0xff]
    %v229 = vld [vmem:[%s2 + $0x10] sm:$0xff]
    %v230 = vld [vmem:[%s2 + $0x18] sm:$0xff]
    %v231 = vld [vmem:[%s2 + $0x20] sm:$0xff]
    %v232 = vld [vmem:[%s2 + $0x28] sm:$0xff]
    %v233 = vld [vmem:[%s2 + $0x30] sm:$0xff]
    %v234 = vld [vmem:[%s2 + $0x38] sm:$0xff]
    %v235 = vld [vmem:[%s2 + $0x40] sm:$0xff]
    %v236 = vld [vmem:[%s2 + $0x48] sm:$0xff]
    %v237 = vld [vmem:[%s2 + $0x50] sm:$0xff]
    %v238 = vld [vmem:[%s2 + $0x58] sm:$0xff]
    %v239 = vld [vmem:[%s2 + $0x60] sm:$0xff]
    %v240 = vld [vmem:[%s2 + $0x68] sm:$0xff]
    %v241 = vld [vmem:[%s2 + $0x70] sm:$0xff]
    %v242 = vld [vmem:[%s2 + $0x78] sm:$0xff]
    %v243 = vld [vmem:[%s2 + $0x80] sm:$0xff]
    %v244 = vld [vmem:[%s2 + $0x88] sm:$0xff]
    %v245 = vld [vmem:[%s2 + $0x90] sm:$0xff]
    %v246 = vld [vmem:[%s2 + $0x98] sm:$0xff]
    %v247 = vld [vmem:[%s2 + $0xa0] sm:$0xff]
    %v248 = vld [vmem:[%s2 + $0xa8] sm:$0xff]
    %v249 = vld [vmem:[%s2 + $0xb0] sm:$0xff]
    %v250 = vld [vmem:[%s2 + $0xb8] sm:$0xff]
    %v251 = vld [vmem:[%s2 + $0xc0] sm:$0xff]
    %v252 = vld [vmem:[%s2 + $0xc8] sm:$0xff]
    %v253 = vld [vmem:[%s2 + $0xd0] sm:$0xff]
    %v254 = vld [vmem:[%s2 + $0xd8] sm:$0xff]
    %v255 = vld [vmem:[%s2 + $0xe0] sm:$0xff]
    %v256 = vld [vmem:[%s2 + $0xe8] sm:$0xff]
    %v257 = vld [vmem:[%s2 + $0xf0] sm:$0xff]
    %v258 = vld [vmem:[%s2 + $0xf8] sm:$0xff]
    %259 = vmatpush.msra.mxu0 %v242
    %260 = vmatpush.msra.mxu0 %v241
    %261 = vmatpush.msra.mxu0 %v240
    %262 = vmatpush.msra.mxu0 %v239
    %263 = vmatpush.msra.mxu0 %v238
    %264 = vmatpush.msra.mxu0 %v237
    %265 = vmatpush.msra.mxu0 %v236
    %266 = vmatpush.msra.mxu0 %v235
    %267 = vmatpush.msra.mxu0 %v234
    %268 = vmatpush.msra.mxu0 %v233
    %269 = vmatpush.msra.mxu0 %v232
    %270 = vmatpush.msra.mxu0 %v231
    %271 = vmatpush.msra.mxu0 %v230
    %272 = vmatpush.msra.mxu0 %v229
    %273 = vmatpush.msra.mxu0 %v228
    %274 = vmatpush.msra.mxu0 %v227
    %275 = vmatmul.f32.gmra.mxu0 %v115
    %v276 = vpop.f32.mrf.mxu0
    %v277 = vadd.f32 0.0, %v276
    %278 = vmatmul.f32.gmra.mxu0 %v118
    %v279 = vpop.f32.mrf.mxu0
    %v280 = vadd.f32 0.0, %v279
    %281 = vmatmul.f32.gmra.mxu0 %v121
    %v282 = vpop.f32.mrf.mxu0
    %v283 = vadd.f32 0.0, %v282
    %284 = vmatmul.f32.gmra.mxu0 %v124
    %v285 = vpop.f32.mrf.mxu0
    %v286 = vadd.f32 0.0, %v285
    %287 = vmatmul.f32.gmra.mxu0 %v127
    %v288 = vpop.f32.mrf.mxu0
    %v289 = vadd.f32 0.0, %v288
    %290 = vmatmul.f32.gmra.mxu0 %v130
    %v291 = vpop.f32.mrf.mxu0
    %v292 = vadd.f32 0.0, %v291
    %293 = vmatmul.f32.gmra.mxu0 %v133
    %v294 = vpop.f32.mrf.mxu0
    %v295 = vadd.f32 0.0, %v294
    %296 = vmatmul.f32.gmra.mxu0 %v136
    %v297 = vpop.f32.mrf.mxu0
    %v298 = vadd.f32 0.0, %v297
    %299 = vmatmul.f32.gmra.mxu0 %v139
    %v300 = vpop.f32.mrf.mxu0
    %v301 = vadd.f32 0.0, %v300
    %302 = vmatmul.f32.gmra.mxu0 %v142
    %v303 = vpop.f32.mrf.mxu0
    %v304 = vadd.f32 0.0, %v303
    %305 = vmatmul.f32.gmra.mxu0 %v145
    %v306 = vpop.f32.mrf.mxu0
    %v307 = vadd.f32 0.0, %v306
    %308 = vmatmul.f32.gmra.mxu0 %v148
    %v309 = vpop.f32.mrf.mxu0
    %v310 = vadd.f32 0.0, %v309
    %311 = vmatmul.f32.gmra.mxu0 %v151
    %v312 = vpop.f32.mrf.mxu0
    %v313 = vadd.f32 0.0, %v312
    %314 = vmatmul.f32.gmra.mxu0 %v154
    %v315 = vpop.f32.mrf.mxu0
    %v316 = vadd.f32 0.0, %v315
    %317 = vmatmul.f32.gmra.mxu0 %v157
    %v318 = vpop.f32.mrf.mxu0
    %v319 = vadd.f32 0.0, %v318
    %320 = vmatmul.f32.gmra.mxu0 %v160
    %v321 = vpop.f32.mrf.mxu0
    %v322 = vadd.f32 0.0, %v321
    %323 = vdwg.mxu0
    %324 = vmatpush.msra.mxu0 %v258
    %325 = vmatpush.msra.mxu0 %v257
    %326 = vmatpush.msra.mxu0 %v256
    %327 = vmatpush.msra.mxu0 %v255
    %328 = vmatpush.msra.mxu0 %v254
    %329 = vmatpush.msra.mxu0 %v253
    %330 = vmatpush.msra.mxu0 %v252
    %331 = vmatpush.msra.mxu0 %v251
    %332 = vmatpush.msra.mxu0 %v250
    %333 = vmatpush.msra.mxu0 %v249
    %334 = vmatpush.msra.mxu0 %v248
    %335 = vmatpush.msra.mxu0 %v247
    %336 = vmatpush.msra.mxu0 %v246
    %337 = vmatpush.msra.mxu0 %v245
    %338 = vmatpush.msra.mxu0 %v244
    %339 = vmatpush.msra.mxu0 %v243
    %340 = vmatmul.f32.gmra.mxu0 %v180
    %v341 = vpop.f32.mrf.mxu0
    %v342 = vadd.f32 %v277, %v341
    %343 = vmatmul.f32.gmra.mxu0 %v183
    %v344 = vpop.f32.mrf.mxu0
    %v345 = vadd.f32 %v280, %v344
    %346 = vmatmul.f32.gmra.mxu0 %v186
    %v347 = vpop.f32.mrf.mxu0
    %v348 = vadd.f32 %v283, %v347
    %349 = vmatmul.f32.gmra.mxu0 %v189
    %v350 = vpop.f32.mrf.mxu0
    %v351 = vadd.f32 %v286, %v350
    %352 = vmatmul.f32.gmra.mxu0 %v192
    %v353 = vpop.f32.mrf.mxu0
    %v354 = vadd.f32 %v289, %v353
    %355 = vmatmul.f32.gmra.mxu0 %v195
    %v356 = vpop.f32.mrf.mxu0
    %v357 = vadd.f32 %v292, %v356
    %358 = vmatmul.f32.gmra.mxu0 %v198
    %v359 = vpop.f32.mrf.mxu0
    %v360 = vadd.f32 %v295, %v359
    %361 = vmatmul.f32.gmra.mxu0 %v201
    %v362 = vpop.f32.mrf.mxu0
    %v363 = vadd.f32 %v298, %v362
    %364 = vmatmul.f32.gmra.mxu0 %v204
    %v365 = vpop.f32.mrf.mxu0
    %v366 = vadd.f32 %v301, %v365
    %367 = vmatmul.f32.gmra.mxu0 %v207
    %v368 = vpop.f32.mrf.mxu0
    %v369 = vadd.f32 %v304, %v368
    %370 = vmatmul.f32.gmra.mxu0 %v210
    %v371 = vpop.f32.mrf.mxu0
    %v372 = vadd.f32 %v307, %v371
    %373 = vmatmul.f32.gmra.mxu0 %v213
    %v374 = vpop.f32.mrf.mxu0
    %v375 = vadd.f32 %v310, %v374
    %376 = vmatmul.f32.gmra.mxu0 %v216
    %v377 = vpop.f32.mrf.mxu0
    %v378 = vadd.f32 %v313, %v377
    %379 = vmatmul.f32.gmra.mxu0 %v219
    %v380 = vpop.f32.mrf.mxu0
    %v381 = vadd.f32 %v316, %v380
    %382 = vmatmul.f32.gmra.mxu0 %v222
    %v383 = vpop.f32.mrf.mxu0
    %v384 = vadd.f32 %v319, %v383
    %385 = vmatmul.f32.gmra.mxu0 %v225
    %v386 = vpop.f32.mrf.mxu0
    %v387 = vadd.f32 %v322, %v386
    %388 = vdwg.mxu0
    %v389 = vmul.f32 %v342, 0.03125
    %v390 = vmul.f32 %v345, 0.03125
    %v391 = vmul.f32 %v348, 0.03125
    %v392 = vmul.f32 %v351, 0.03125
    %v393 = vmul.f32 %v354, 0.03125
    %v394 = vmul.f32 %v357, 0.03125
    %v395 = vmul.f32 %v360, 0.03125
    %v396 = vmul.f32 %v363, 0.03125
    %v397 = vmul.f32 %v366, 0.03125
    %v398 = vmul.f32 %v369, 0.03125
    %v399 = vmul.f32 %v372, 0.03125
    %v400 = vmul.f32 %v375, 0.03125
    %v401 = vmul.f32 %v378, 0.03125
    %v402 = vmul.f32 %v381, 0.03125
    %v403 = vmul.f32 %v384, 0.03125
    %v404 = vmul.f32 %v387, 0.03125
    %v405 = vmul.f32 %v115, %v115
    %v406 = vmul.f32 %v180, %v180
    %v407 = vmul.f32 %v118, %v118
    %v408 = vmul.f32 %v183, %v183
    %v409 = vmul.f32 %v121, %v121
    %v410 = vmul.f32 %v186, %v186
    %v411 = vmul.f32 %v124, %v124
    %v412 = vmul.f32 %v189, %v189
    %v413 = vmul.f32 %v127, %v127
    %v414 = vmul.f32 %v192, %v192
    %v415 = vmul.f32 %v130, %v130
    %v416 = vmul.f32 %v195, %v195
    %v417 = vmul.f32 %v133, %v133
    %v418 = vmul.f32 %v198, %v198
    %v419 = vmul.f32 %v136, %v136
    %v420 = vmul.f32 %v201, %v201
    %v421 = vmul.f32 %v139, %v139
    %v422 = vmul.f32 %v204, %v204
    %v423 = vmul.f32 %v142, %v142
    %v424 = vmul.f32 %v207, %v207
    %v425 = vmul.f32 %v145, %v145
    %v426 = vmul.f32 %v210, %v210
    %v427 = vmul.f32 %v148, %v148
    %v428 = vmul.f32 %v213, %v213
    %v429 = vmul.f32 %v151, %v151
    %v430 = vmul.f32 %v216, %v216
    %v431 = vmul.f32 %v154, %v154
    %v432 = vmul.f32 %v219, %v219
    %v433 = vmul.f32 %v157, %v157
    %v434 = vmul.f32 %v222, %v222
    %v435 = vmul.f32 %v160, %v160
    %v436 = vmul.f32 %v225, %v225
    %437 = vmatpush.msra.mxu0 %v242
    %438 = vmatpush.msra.mxu0 %v241
    %439 = vmatpush.msra.mxu0 %v240
    %440 = vmatpush.msra.mxu0 %v239
    %441 = vmatpush.msra.mxu0 %v238
    %442 = vmatpush.msra.mxu0 %v237
    %443 = vmatpush.msra.mxu0 %v236
    %444 = vmatpush.msra.mxu0 %v235
    %445 = vmatpush.msra.mxu0 %v234
    %446 = vmatpush.msra.mxu0 %v233
    %447 = vmatpush.msra.mxu0 %v232
    %448 = vmatpush.msra.mxu0 %v231
    %449 = vmatpush.msra.mxu0 %v230
    %450 = vmatpush.msra.mxu0 %v229
    %451 = vmatpush.msra.mxu0 %v228
    %452 = vmatpush.msra.mxu0 %v227
    %453 = vmatmul.f32.gmra.mxu0 %v405
    %v454 = vpop.f32.mrf.mxu0
    %v455 = vadd.f32 0.0, %v454
    %456 = vmatmul.f32.gmra.mxu0 %v407
    %v457 = vpop.f32.mrf.mxu0
    %v458 = vadd.f32 0.0, %v457
    %459 = vmatmul.f32.gmra.mxu0 %v409
    %v460 = vpop.f32.mrf.mxu0
    %v461 = vadd.f32 0.0, %v460
    %462 = vmatmul.f32.gmra.mxu0 %v411
    %v463 = vpop.f32.mrf.mxu0
    %v464 = vadd.f32 0.0, %v463
    %465 = vmatmul.f32.gmra.mxu0 %v413
    %v466 = vpop.f32.mrf.mxu0
    %v467 = vadd.f32 0.0, %v466
    %468 = vmatmul.f32.gmra.mxu0 %v415
    %v469 = vpop.f32.mrf.mxu0
    %v470 = vadd.f32 0.0, %v469
    %471 = vmatmul.f32.gmra.mxu0 %v417
    %v472 = vpop.f32.mrf.mxu0
    %v473 = vadd.f32 0.0, %v472
    %474 = vmatmul.f32.gmra.mxu0 %v419
    %v475 = vpop.f32.mrf.mxu0
    %v476 = vadd.f32 0.0, %v475
    %477 = vmatmul.f32.gmra.mxu0 %v421
    %v478 = vpop.f32.mrf.mxu0
    %v479 = vadd.f32 0.0, %v478
    %480 = vmatmul.f32.gmra.mxu0 %v423
    %v481 = vpop.f32.mrf.mxu0
    %v482 = vadd.f32 0.0, %v481
    %483 = vmatmul.f32.gmra.mxu0 %v425
    %v484 = vpop.f32.mrf.mxu0
    %v485 = vadd.f32 0.0, %v484
    %486 = vmatmul.f32.gmra.mxu0 %v427
    %v487 = vpop.f32.mrf.mxu0
    %v488 = vadd.f32 0.0, %v487
    %489 = vmatmul.f32.gmra.mxu0 %v429
    %v490 = vpop.f32.mrf.mxu0
    %v491 = vadd.f32 0.0, %v490
    %492 = vmatmul.f32.gmra.mxu0 %v431
    %v493 = vpop.f32.mrf.mxu0
    %v494 = vadd.f32 0.0, %v493
    %495 = vmatmul.f32.gmra.mxu0 %v433
    %v496 = vpop.f32.mrf.mxu0
    %v497 = vadd.f32 0.0, %v496
    %498 = vmatmul.f32.gmra.mxu0 %v435
    %v499 = vpop.f32.mrf.mxu0
    %v500 = vadd.f32 0.0, %v499
    %501 = vdwg.mxu0
    %502 = vmatpush.msra.mxu0 %v258
    %503 = vmatpush.msra.mxu0 %v257
    %504 = vmatpush.msra.mxu0 %v256
    %505 = vmatpush.msra.mxu0 %v255
    %506 = vmatpush.msra.mxu0 %v254
    %507 = vmatpush.msra.mxu0 %v253
    %508 = vmatpush.msra.mxu0 %v252
    %509 = vmatpush.msra.mxu0 %v251
    %510 = vmatpush.msra.mxu0 %v250
    %511 = vmatpush.msra.mxu0 %v249
    %512 = vmatpush.msra.mxu0 %v248
    %513 = vmatpush.msra.mxu0 %v247
    %514 = vmatpush.msra.mxu0 %v246
    %515 = vmatpush.msra.mxu0 %v245
    %516 = vmatpush.msra.mxu0 %v244
    %517 = vmatpush.msra.mxu0 %v243
    %518 = vmatmul.f32.gmra.mxu0 %v406
    %v519 = vpop.f32.mrf.mxu0
    %v520 = vadd.f32 %v455, %v519
    %521 = vmatmul.f32.gmra.mxu0 %v408
    %v522 = vpop.f32.mrf.mxu0
    %v523 = vadd.f32 %v458, %v522
    %524 = vmatmul.f32.gmra.mxu0 %v410
    %v525 = vpop.f32.mrf.mxu0
    %v526 = vadd.f32 %v461, %v525
    %527 = vmatmul.f32.gmra.mxu0 %v412
    %v528 = vpop.f32.mrf.mxu0
    %v529 = vadd.f32 %v464, %v528
    %530 = vmatmul.f32.gmra.mxu0 %v414
    %v531 = vpop.f32.mrf.mxu0
    %v532 = vadd.f32 %v467, %v531
    %533 = vmatmul.f32.gmra.mxu0 %v416
    %v534 = vpop.f32.mrf.mxu0
    %v535 = vadd.f32 %v470, %v534
    %536 = vmatmul.f32.gmra.mxu0 %v418
    %v537 = vpop.f32.mrf.mxu0
    %v538 = vadd.f32 %v473, %v537
    %539 = vmatmul.f32.gmra.mxu0 %v420
    %v540 = vpop.f32.mrf.mxu0
    %v541 = vadd.f32 %v476, %v540
    %542 = vmatmul.f32.gmra.mxu0 %v422
    %v543 = vpop.f32.mrf.mxu0
    %v544 = vadd.f32 %v479, %v543
    %545 = vmatmul.f32.gmra.mxu0 %v424
    %v546 = vpop.f32.mrf.mxu0
    %v547 = vadd.f32 %v482, %v546
    %548 = vmatmul.f32.gmra.mxu0 %v426
    %v549 = vpop.f32.mrf.mxu0
    %v550 = vadd.f32 %v485, %v549
    %551 = vmatmul.f32.gmra.mxu0 %v428
    %v552 = vpop.f32.mrf.mxu0
    %v553 = vadd.f32 %v488, %v552
    %554 = vmatmul.f32.gmra.mxu0 %v430
    %v555 = vpop.f32.mrf.mxu0
    %v556 = vadd.f32 %v491, %v555
    %557 = vmatmul.f32.gmra.mxu0 %v432
    %v558 = vpop.f32.mrf.mxu0
    %v559 = vadd.f32 %v494, %v558
    %560 = vmatmul.f32.gmra.mxu0 %v434
    %v561 = vpop.f32.mrf.mxu0
    %v562 = vadd.f32 %v497, %v561
    %563 = vmatmul.f32.gmra.mxu0 %v436
    %v564 = vpop.f32.mrf.mxu0
    %v565 = vadd.f32 %v500, %v564
    %566 = vdwg.mxu0
    %v567 = vmul.f32 %v520, 0.03125
    %v568 = vmul.f32 %v523, 0.03125
    %v569 = vmul.f32 %v526, 0.03125
    %v570 = vmul.f32 %v529, 0.03125
    %v571 = vmul.f32 %v532, 0.03125
    %v572 = vmul.f32 %v535, 0.03125
    %v573 = vmul.f32 %v538, 0.03125
    %v574 = vmul.f32 %v541, 0.03125
    %v575 = vmul.f32 %v544, 0.03125
    %v576 = vmul.f32 %v547, 0.03125
    %v577 = vmul.f32 %v550, 0.03125
    %v578 = vmul.f32 %v553, 0.03125
    %v579 = vmul.f32 %v556, 0.03125
    %v580 = vmul.f32 %v559, 0.03125
    %v581 = vmul.f32 %v562, 0.03125
    %v582 = vmul.f32 %v565, 0.03125
    %v583 = vmul.f32 %v389, %v389
    %v584 = vmul.f32 %v390, %v390
    %v585 = vmul.f32 %v391, %v391
    %v586 = vmul.f32 %v392, %v392
    %v587 = vmul.f32 %v393, %v393
    %v588 = vmul.f32 %v394, %v394
    %v589 = vmul.f32 %v395, %v395
    %v590 = vmul.f32 %v396, %v396
    %v591 = vmul.f32 %v397, %v397
    %v592 = vmul.f32 %v398, %v398
    %v593 = vmul.f32 %v399, %v399
    %v594 = vmul.f32 %v400, %v400
    %v595 = vmul.f32 %v401, %v401
    %v596 = vmul.f32 %v402, %v402
    %v597 = vmul.f32 %v403, %v403
    %v598 = vmul.f32 %v404, %v404
    %v599 = vsub.f32 %v567, %v583
    %v600 = vsub.f32 %v568, %v584
    %v601 = vsub.f32 %v569, %v585
    %v602 = vsub.f32 %v570, %v586
    %v603 = vsub.f32 %v571, %v587
    %v604 = vsub.f32 %v572, %v588
    %v605 = vsub.f32 %v573, %v589
    %v606 = vsub.f32 %v574, %v590
    %v607 = vsub.f32 %v575, %v591
    %v608 = vsub.f32 %v576, %v592
    %v609 = vsub.f32 %v577, %v593
    %v610 = vsub.f32 %v578, %v594
    %v611 = vsub.f32 %v579, %v595
    %v612 = vsub.f32 %v580, %v596
    %v613 = vsub.f32 %v581, %v597
    %v614 = vsub.f32 %v582, %v598
    %v615 = vmax.f32 %v599, 0.0
    %v616 = vmax.f32 %v600, 0.0
    %v617 = vmax.f32 %v601, 0.0
    %v618 = vmax.f32 %v602, 0.0
    %v619 = vmax.f32 %v603, 0.0
    %v620 = vmax.f32 %v604, 0.0
    %v621 = vmax.f32 %v605, 0.0
    %v622 = vmax.f32 %v606, 0.0
    %v623 = vmax.f32 %v607, 0.0
    %v624 = vmax.f32 %v608, 0.0
    %v625 = vmax.f32 %v609, 0.0
    %v626 = vmax.f32 %v610, 0.0
    %v627 = vmax.f32 %v611, 0.0
    %v628 = vmax.f32 %v612, 0.0
    %v629 = vmax.f32 %v613, 0.0
    %v630 = vmax.f32 %v614, 0.0
    %v631 = vadd.f32 %v615, 1e-05
    %v632 = vadd.f32 %v616, 1e-05
    %v633 = vadd.f32 %v617, 1e-05
    %v634 = vadd.f32 %v618, 1e-05
    %v635 = vadd.f32 %v619, 1e-05
    %v636 = vadd.f32 %v620, 1e-05
    %v637 = vadd.f32 %v621, 1e-05
    %v638 = vadd.f32 %v622, 1e-05
    %v639 = vadd.f32 %v623, 1e-05
    %v640 = vadd.f32 %v624, 1e-05
    %v641 = vadd.f32 %v625, 1e-05
    %v642 = vadd.f32 %v626, 1e-05
    %v643 = vadd.f32 %v627, 1e-05
    %v644 = vadd.f32 %v628, 1e-05
    %v645 = vadd.f32 %v629, 1e-05
    %v646 = vadd.f32 %v630, 1e-05
    %v647 = vrsqrt.pop %v631
    %v648 = vmul.f32 %v647, %v631
    %v649 = vmul.f32 %v648, %v647
    %v650 = vmul.f32 0.5, %v649
    %v651 = vsub.f32 1.5, %v650
    %v652 = vmul.f32 %v647, %v651
    %vm653 = vweird.f32 %v631
    %vm654 = vweird.f32 %v647
    %vm655 = vmor %vm653, %vm654
    %v656 = vsel %vm655, %v647, %v652
    %v657 = vrsqrt.pop %v632
    %v658 = vmul.f32 %v657, %v632
    %v659 = vmul.f32 %v658, %v657
    %v660 = vmul.f32 0.5, %v659
    %v661 = vsub.f32 1.5, %v660
    %v662 = vmul.f32 %v657, %v661
    %vm663 = vweird.f32 %v632
    %vm664 = vweird.f32 %v657
    %vm665 = vmor %vm663, %vm664
    %v666 = vsel %vm665, %v657, %v662
    %v667 = vrsqrt.pop %v633
    %v668 = vmul.f32 %v667, %v633
    %v669 = vmul.f32 %v668, %v667
    %v670 = vmul.f32 0.5, %v669
    %v671 = vsub.f32 1.5, %v670
    %v672 = vmul.f32 %v667, %v671
    %vm673 = vweird.f32 %v633
    %vm674 = vweird.f32 %v667
    %vm675 = vmor %vm673, %vm674
    %v676 = vsel %vm675, %v667, %v672
    %v677 = vrsqrt.pop %v634
    %v678 = vmul.f32 %v677, %v634
    %v679 = vmul.f32 %v678, %v677
    %v680 = vmul.f32 0.5, %v679
    %v681 = vsub.f32 1.5, %v680
    %v682 = vmul.f32 %v677, %v681
    %vm683 = vweird.f32 %v634
    %vm684 = vweird.f32 %v677
    %vm685 = vmor %vm683, %vm684
    %v686 = vsel %vm685, %v677, %v682
    %v687 = vrsqrt.pop %v635
    %v688 = vmul.f32 %v687, %v635
    %v689 = vmul.f32 %v688, %v687
    %v690 = vmul.f32 0.5, %v689
    %v691 = vsub.f32 1.5, %v690
    %v692 = vmul.f32 %v687, %v691
    %vm693 = vweird.f32 %v635
    %vm694 = vweird.f32 %v687
    %vm695 = vmor %vm693, %vm694
    %v696 = vsel %vm695, %v687, %v692
    %v697 = vrsqrt.pop %v636
    %v698 = vmul.f32 %v697, %v636
    %v699 = vmul.f32 %v698, %v697
    %v700 = vmul.f32 0.5, %v699
    %v701 = vsub.f32 1.5, %v700
    %v702 = vmul.f32 %v697, %v701
    %vm703 = vweird.f32 %v636
    %vm704 = vweird.f32 %v697
    %vm705 = vmor %vm703, %vm704
    %v706 = vsel %vm705, %v697, %v702
    %v707 = vrsqrt.pop %v637
    %v708 = vmul.f32 %v707, %v637
    %v709 = vmul.f32 %v708, %v707
    %v710 = vmul.f32 0.5, %v709
    %v711 = vsub.f32 1.5, %v710
    %v712 = vmul.f32 %v707, %v711
    %vm713 = vweird.f32 %v637
    %vm714 = vweird.f32 %v707
    %vm715 = vmor %vm713, %vm714
    %v716 = vsel %vm715, %v707, %v712
    %v717 = vrsqrt.pop %v638
    %v718 = vmul.f32 %v717, %v638
    %v719 = vmul.f32 %v718, %v717
    %v720 = vmul.f32 0.5, %v719
    %v721 = vsub.f32 1.5, %v720
    %v722 = vmul.f32 %v717, %v721
    %vm723 = vweird.f32 %v638
    %vm724 = vweird.f32 %v717
    %vm725 = vmor %vm723, %vm724
    %v726 = vsel %vm725, %v717, %v722
    %v727 = vrsqrt.pop %v639
    %v728 = vmul.f32 %v727, %v639
    %v729 = vmul.f32 %v728, %v727
    %v730 = vmul.f32 0.5, %v729
    %v731 = vsub.f32 1.5, %v730
    %v732 = vmul.f32 %v727, %v731
    %vm733 = vweird.f32 %v639
    %vm734 = vweird.f32 %v727
    %vm735 = vmor %vm733, %vm734
    %v736 = vsel %vm735, %v727, %v732
    %v737 = vrsqrt.pop %v640
    %v738 = vmul.f32 %v737, %v640
    %v739 = vmul.f32 %v738, %v737
    %v740 = vmul.f32 0.5, %v739
    %v741 = vsub.f32 1.5, %v740
    %v742 = vmul.f32 %v737, %v741
    %vm743 = vweird.f32 %v640
    %vm744 = vweird.f32 %v737
    %vm745 = vmor %vm743, %vm744
    %v746 = vsel %vm745, %v737, %v742
    %v747 = vrsqrt.pop %v641
    %v748 = vmul.f32 %v747, %v641
    %v749 = vmul.f32 %v748, %v747
    %v750 = vmul.f32 0.5, %v749
    %v751 = vsub.f32 1.5, %v750
    %v752 = vmul.f32 %v747, %v751
    %vm753 = vweird.f32 %v641
    %vm754 = vweird.f32 %v747
    %vm755 = vmor %vm753, %vm754
    %v756 = vsel %vm755, %v747, %v752
    %v757 = vrsqrt.pop %v642
    %v758 = vmul.f32 %v757, %v642
    %v759 = vmul.f32 %v758, %v757
    %v760 = vmul.f32 0.5, %v759
    %v761 = vsub.f32 1.5, %v760
    %v762 = vmul.f32 %v757, %v761
    %vm763 = vweird.f32 %v642
    %vm764 = vweird.f32 %v757
    %vm765 = vmor %vm763, %vm764
    %v766 = vsel %vm765, %v757, %v762
    %v767 = vrsqrt.pop %v643
    %v768 = vmul.f32 %v767, %v643
    %v769 = vmul.f32 %v768, %v767
    %v770 = vmul.f32 0.5, %v769
    %v771 = vsub.f32 1.5, %v770
    %v772 = vmul.f32 %v767, %v771
    %vm773 = vweird.f32 %v643
    %vm774 = vweird.f32 %v767
    %vm775 = vmor %vm773, %vm774
    %v776 = vsel %vm775, %v767, %v772
    %v777 = vrsqrt.pop %v644
    %v778 = vmul.f32 %v777, %v644
    %v779 = vmul.f32 %v778, %v777
    %v780 = vmul.f32 0.5, %v779
    %v781 = vsub.f32 1.5, %v780
    %v782 = vmul.f32 %v777, %v781
    %vm783 = vweird.f32 %v644
    %vm784 = vweird.f32 %v777
    %vm785 = vmor %vm783, %vm784
    %v786 = vsel %vm785, %v777, %v782
    %v787 = vrsqrt.pop %v645
    %v788 = vmul.f32 %v787, %v645
    %v789 = vmul.f32 %v788, %v787
    %v790 = vmul.f32 0.5, %v789
    %v791 = vsub.f32 1.5, %v790
    %v792 = vmul.f32 %v787, %v791
    %vm793 = vweird.f32 %v645
    %vm794 = vweird.f32 %v787
    %vm795 = vmor %vm793, %vm794
    %v796 = vsel %vm795, %v787, %v792
    %v797 = vrsqrt.pop %v646
    %v798 = vmul.f32 %v797, %v646
    %v799 = vmul.f32 %v798, %v797
    %v800 = vmul.f32 0.5, %v799
    %v801 = vsub.f32 1.5, %v800
    %v802 = vmul.f32 %v797, %v801
    %vm803 = vweird.f32 %v646
    %vm804 = vweird.f32 %v797
    %vm805 = vmor %vm803, %vm804
    %v806 = vsel %vm805, %v797, %v802
    %v807 = vld [vmem:[%s3] sm:$0xff]
    %v808 = vld [vmem:[%s3 + $0x8] sm:$0xff]
    %vm809 = vcmask 64512
    %v811 = vsel %vm809, %v389, 0
    %v814 = vsel %vm809, %v390, 0
    %v817 = vsel %vm809, %v391, 0
    %v820 = vsel %vm809, %v392, 0
    %v823 = vsel %vm809, %v393, 0
    %v826 = vsel %vm809, %v394, 0
    %v829 = vsel %vm809, %v395, 0
    %v832 = vsel %vm809, %v396, 0
    %v835 = vsel %vm809, %v397, 0
    %v838 = vsel %vm809, %v398, 0
    %v841 = vsel %vm809, %v399, 0
    %v844 = vsel %vm809, %v400, 0
    %v847 = vsel %vm809, %v401, 0
    %v850 = vsel %vm809, %v402, 0
    %v853 = vsel %vm809, %v403, 0
    %v856 = vsel %vm809, %v404, 0
    %858 = vmatpush.msra.mxu0 0.0
    %859 = vmatpush.msra.mxu0 0.0
    %860 = vmatpush.msra.mxu0 0.0
    %861 = vmatpush.msra.mxu0 0.0
    %862 = vmatpush.msra.mxu0 0.0
    %863 = vmatpush.msra.mxu0 0.0
    %864 = vmatpush.msra.mxu0 0.0
    %865 = vmatpush.msra.mxu0 0.0
    %866 = vmatpush.msra.mxu0 0.0
    %867 = vmatpush.msra.mxu0 0.0
    %868 = vmatpush.msra.mxu0 0.0
    %869 = vmatpush.msra.mxu0 0.0
    %870 = vmatpush.msra.mxu0 0.0
    %871 = vmatpush.msra.mxu0 0.0
    %872 = vmatpush.msra.mxu0 0.0
    %873 = vmatpush.msra.mxu0 %v807
    %874 = vmatmul.f32.gmra.mxu0 %v811
    %v875 = vpop.f32.mrf.mxu0
    %v876 = vadd.f32 0.0, %v875
    %877 = vmatmul.f32.gmra.mxu0 %v814
    %v878 = vpop.f32.mrf.mxu0
    %v879 = vadd.f32 0.0, %v878
    %880 = vmatmul.f32.gmra.mxu0 %v817
    %v881 = vpop.f32.mrf.mxu0
    %v882 = vadd.f32 0.0, %v881
    %883 = vmatmul.f32.gmra.mxu0 %v820
    %v884 = vpop.f32.mrf.mxu0
    %v885 = vadd.f32 0.0, %v884
    %886 = vmatmul.f32.gmra.mxu0 %v823
    %v887 = vpop.f32.mrf.mxu0
    %v888 = vadd.f32 0.0, %v887
    %889 = vmatmul.f32.gmra.mxu0 %v826
    %v890 = vpop.f32.mrf.mxu0
    %v891 = vadd.f32 0.0, %v890
    %892 = vmatmul.f32.gmra.mxu0 %v829
    %v893 = vpop.f32.mrf.mxu0
    %v894 = vadd.f32 0.0, %v893
    %895 = vmatmul.f32.gmra.mxu0 %v832
    %v896 = vpop.f32.mrf.mxu0
    %v897 = vadd.f32 0.0, %v896
    %898 = vmatmul.f32.gmra.mxu0 %v835
    %v899 = vpop.f32.mrf.mxu0
    %v900 = vadd.f32 0.0, %v899
    %901 = vmatmul.f32.gmra.mxu0 %v838
    %v902 = vpop.f32.mrf.mxu0
    %v903 = vadd.f32 0.0, %v902
    %904 = vmatmul.f32.gmra.mxu0 %v841
    %v905 = vpop.f32.mrf.mxu0
    %v906 = vadd.f32 0.0, %v905
    %907 = vmatmul.f32.gmra.mxu0 %v844
    %v908 = vpop.f32.mrf.mxu0
    %v909 = vadd.f32 0.0, %v908
    %910 = vmatmul.f32.gmra.mxu0 %v847
    %v911 = vpop.f32.mrf.mxu0
    %v912 = vadd.f32 0.0, %v911
    %913 = vmatmul.f32.gmra.mxu0 %v850
    %v914 = vpop.f32.mrf.mxu0
    %v915 = vadd.f32 0.0, %v914
    %916 = vmatmul.f32.gmra.mxu0 %v853
    %v917 = vpop.f32.mrf.mxu0
    %v918 = vadd.f32 0.0, %v917
    %919 = vmatmul.f32.gmra.mxu0 %v856
    %v920 = vpop.f32.mrf.mxu0
    %v921 = vadd.f32 0.0, %v920
    %922 = vdwg.mxu0
    %923 = vmatpush.msra.mxu0 0.0
    %924 = vmatpush.msra.mxu0 0.0
    %925 = vmatpush.msra.mxu0 0.0
    %926 = vmatpush.msra.mxu0 0.0
    %927 = vmatpush.msra.mxu0 0.0
    %928 = vmatpush.msra.mxu0 0.0
    %929 = vmatpush.msra.mxu0 0.0
    %930 = vmatpush.msra.mxu0 0.0
    %931 = vmatpush.msra.mxu0 0.0
    %932 = vmatpush.msra.mxu0 0.0
    %933 = vmatpush.msra.mxu0 0.0
    %934 = vmatpush.msra.mxu0 0.0
    %935 = vmatpush.msra.mxu0 0.0
    %936 = vmatpush.msra.mxu0 0.0
    %937 = vmatpush.msra.mxu0 0.0
    %938 = vmatpush.msra.mxu0 %v808
    %939 = vmatmul.f32.gmra.mxu0 %v811
    %v940 = vpop.f32.mrf.mxu0
    %v941 = vadd.f32 0.0, %v940
    %942 = vmatmul.f32.gmra.mxu0 %v814
    %v943 = vpop.f32.mrf.mxu0
    %v944 = vadd.f32 0.0, %v943
    %945 = vmatmul.f32.gmra.mxu0 %v817
    %v946 = vpop.f32.mrf.mxu0
    %v947 = vadd.f32 0.0, %v946
    %948 = vmatmul.f32.gmra.mxu0 %v820
    %v949 = vpop.f32.mrf.mxu0
    %v950 = vadd.f32 0.0, %v949
    %951 = vmatmul.f32.gmra.mxu0 %v823
    %v952 = vpop.f32.mrf.mxu0
    %v953 = vadd.f32 0.0, %v952
    %954 = vmatmul.f32.gmra.mxu0 %v826
    %v955 = vpop.f32.mrf.mxu0
    %v956 = vadd.f32 0.0, %v955
    %957 = vmatmul.f32.gmra.mxu0 %v829
    %v958 = vpop.f32.mrf.mxu0
    %v959 = vadd.f32 0.0, %v958
    %960 = vmatmul.f32.gmra.mxu0 %v832
    %v961 = vpop.f32.mrf.mxu0
    %v962 = vadd.f32 0.0, %v961
    %963 = vmatmul.f32.gmra.mxu0 %v835
    %v964 = vpop.f32.mrf.mxu0
    %v965 = vadd.f32 0.0, %v964
    %966 = vmatmul.f32.gmra.mxu0 %v838
    %v967 = vpop.f32.mrf.mxu0
    %v968 = vadd.f32 0.0, %v967
    %969 = vmatmul.f32.gmra.mxu0 %v841
    %v970 = vpop.f32.mrf.mxu0
    %v971 = vadd.f32 0.0, %v970
    %972 = vmatmul.f32.gmra.mxu0 %v844
    %v973 = vpop.f32.mrf.mxu0
    %v974 = vadd.f32 0.0, %v973
    %975 = vmatmul.f32.gmra.mxu0 %v847
    %v976 = vpop.f32.mrf.mxu0
    %v977 = vadd.f32 0.0, %v976
    %978 = vmatmul.f32.gmra.mxu0 %v850
    %v979 = vpop.f32.mrf.mxu0
    %v980 = vadd.f32 0.0, %v979
    %981 = vmatmul.f32.gmra.mxu0 %v853
    %v982 = vpop.f32.mrf.mxu0
    %v983 = vadd.f32 0.0, %v982
    %984 = vmatmul.f32.gmra.mxu0 %v856
    %v985 = vpop.f32.mrf.mxu0
    %v986 = vadd.f32 0.0, %v985
    %987 = vdwg.mxu0
    %v989 = vsel %vm809, %v656, 0
    %v992 = vsel %vm809, %v666, 0
    %v995 = vsel %vm809, %v676, 0
    %v998 = vsel %vm809, %v686, 0
    %v1001 = vsel %vm809, %v696, 0
    %v1004 = vsel %vm809, %v706, 0
    %v1007 = vsel %vm809, %v716, 0
    %v1010 = vsel %vm809, %v726, 0
    %v1013 = vsel %vm809, %v736, 0
    %v1016 = vsel %vm809, %v746, 0
    %v1019 = vsel %vm809, %v756, 0
    %v1022 = vsel %vm809, %v766, 0
    %v1025 = vsel %vm809, %v776, 0
    %v1028 = vsel %vm809, %v786, 0
    %v1031 = vsel %vm809, %v796, 0
    %v1034 = vsel %vm809, %v806, 0
    %1036 = vmatpush.msra.mxu0 0.0
    %1037 = vmatpush.msra.mxu0 0.0
    %1038 = vmatpush.msra.mxu0 0.0
    %1039 = vmatpush.msra.mxu0 0.0
    %1040 = vmatpush.msra.mxu0 0.0
    %1041 = vmatpush.msra.mxu0 0.0
    %1042 = vmatpush.msra.mxu0 0.0
    %1043 = vmatpush.msra.mxu0 0.0
    %1044 = vmatpush.msra.mxu0 0.0
    %1045 = vmatpush.msra.mxu0 0.0
    %1046 = vmatpush.msra.mxu0 0.0
    %1047 = vmatpush.msra.mxu0 0.0
    %1048 = vmatpush.msra.mxu0 0.0
    %1049 = vmatpush.msra.mxu0 0.0
    %1050 = vmatpush.msra.mxu0 0.0
    %1051 = vmatpush.msra.mxu0 %v807
    %1052 = vmatmul.f32.gmra.mxu0 %v989
    %v1053 = vpop.f32.mrf.mxu0
    %v1054 = vadd.f32 0.0, %v1053
    %1055 = vmatmul.f32.gmra.mxu0 %v992
    %v1056 = vpop.f32.mrf.mxu0
    %v1057 = vadd.f32 0.0, %v1056
    %1058 = vmatmul.f32.gmra.mxu0 %v995
    %v1059 = vpop.f32.mrf.mxu0
    %v1060 = vadd.f32 0.0, %v1059
    %1061 = vmatmul.f32.gmra.mxu0 %v998
    %v1062 = vpop.f32.mrf.mxu0
    %v1063 = vadd.f32 0.0, %v1062
    %1064 = vmatmul.f32.gmra.mxu0 %v1001
    %v1065 = vpop.f32.mrf.mxu0
    %v1066 = vadd.f32 0.0, %v1065
    %1067 = vmatmul.f32.gmra.mxu0 %v1004
    %v1068 = vpop.f32.mrf.mxu0
    %v1069 = vadd.f32 0.0, %v1068
    %1070 = vmatmul.f32.gmra.mxu0 %v1007
    %v1071 = vpop.f32.mrf.mxu0
    %v1072 = vadd.f32 0.0, %v1071
    %1073 = vmatmul.f32.gmra.mxu0 %v1010
    %v1074 = vpop.f32.mrf.mxu0
    %v1075 = vadd.f32 0.0, %v1074
    %1076 = vmatmul.f32.gmra.mxu0 %v1013
    %v1077 = vpop.f32.mrf.mxu0
    %v1078 = vadd.f32 0.0, %v1077
    %1079 = vmatmul.f32.gmra.mxu0 %v1016
    %v1080 = vpop.f32.mrf.mxu0
    %v1081 = vadd.f32 0.0, %v1080
    %1082 = vmatmul.f32.gmra.mxu0 %v1019
    %v1083 = vpop.f32.mrf.mxu0
    %v1084 = vadd.f32 0.0, %v1083
    %1085 = vmatmul.f32.gmra.mxu0 %v1022
    %v1086 = vpop.f32.mrf.mxu0
    %v1087 = vadd.f32 0.0, %v1086
    %1088 = vmatmul.f32.gmra.mxu0 %v1025
    %v1089 = vpop.f32.mrf.mxu0
    %v1090 = vadd.f32 0.0, %v1089
    %1091 = vmatmul.f32.gmra.mxu0 %v1028
    %v1092 = vpop.f32.mrf.mxu0
    %v1093 = vadd.f32 0.0, %v1092
    %1094 = vmatmul.f32.gmra.mxu0 %v1031
    %v1095 = vpop.f32.mrf.mxu0
    %v1096 = vadd.f32 0.0, %v1095
    %1097 = vmatmul.f32.gmra.mxu0 %v1034
    %v1098 = vpop.f32.mrf.mxu0
    %v1099 = vadd.f32 0.0, %v1098
    %1100 = vdwg.mxu0
    %1101 = vmatpush.msra.mxu0 0.0
    %1102 = vmatpush.msra.mxu0 0.0
    %1103 = vmatpush.msra.mxu0 0.0
    %1104 = vmatpush.msra.mxu0 0.0
    %1105 = vmatpush.msra.mxu0 0.0
    %1106 = vmatpush.msra.mxu0 0.0
    %1107 = vmatpush.msra.mxu0 0.0
    %1108 = vmatpush.msra.mxu0 0.0
    %1109 = vmatpush.msra.mxu0 0.0
    %1110 = vmatpush.msra.mxu0 0.0
    %1111 = vmatpush.msra.mxu0 0.0
    %1112 = vmatpush.msra.mxu0 0.0
    %1113 = vmatpush.msra.mxu0 0.0
    %1114 = vmatpush.msra.mxu0 0.0
    %1115 = vmatpush.msra.mxu0 0.0
    %1116 = vmatpush.msra.mxu0 %v808
    %1117 = vmatmul.f32.gmra.mxu0 %v989
    %v1118 = vpop.f32.mrf.mxu0
    %v1119 = vadd.f32 0.0, %v1118
    %1120 = vmatmul.f32.gmra.mxu0 %v992
    %v1121 = vpop.f32.mrf.mxu0
    %v1122 = vadd.f32 0.0, %v1121
    %1123 = vmatmul.f32.gmra.mxu0 %v995
    %v1124 = vpop.f32.mrf.mxu0
    %v1125 = vadd.f32 0.0, %v1124
    %1126 = vmatmul.f32.gmra.mxu0 %v998
    %v1127 = vpop.f32.mrf.mxu0
    %v1128 = vadd.f32 0.0, %v1127
    %1129 = vmatmul.f32.gmra.mxu0 %v1001
    %v1130 = vpop.f32.mrf.mxu0
    %v1131 = vadd.f32 0.0, %v1130
    %1132 = vmatmul.f32.gmra.mxu0 %v1004
    %v1133 = vpop.f32.mrf.mxu0
    %v1134 = vadd.f32 0.0, %v1133
    %1135 = vmatmul.f32.gmra.mxu0 %v1007
    %v1136 = vpop.f32.mrf.mxu0
    %v1137 = vadd.f32 0.0, %v1136
    %1138 = vmatmul.f32.gmra.mxu0 %v1010
    %v1139 = vpop.f32.mrf.mxu0
    %v1140 = vadd.f32 0.0, %v1139
    %1141 = vmatmul.f32.gmra.mxu0 %v1013
    %v1142 = vpop.f32.mrf.mxu0
    %v1143 = vadd.f32 0.0, %v1142
    %1144 = vmatmul.f32.gmra.mxu0 %v1016
    %v1145 = vpop.f32.mrf.mxu0
    %v1146 = vadd.f32 0.0, %v1145
    %1147 = vmatmul.f32.gmra.mxu0 %v1019
    %v1148 = vpop.f32.mrf.mxu0
    %v1149 = vadd.f32 0.0, %v1148
    %1150 = vmatmul.f32.gmra.mxu0 %v1022
    %v1151 = vpop.f32.mrf.mxu0
    %v1152 = vadd.f32 0.0, %v1151
    %1153 = vmatmul.f32.gmra.mxu0 %v1025
    %v1154 = vpop.f32.mrf.mxu0
    %v1155 = vadd.f32 0.0, %v1154
    %1156 = vmatmul.f32.gmra.mxu0 %v1028
    %v1157 = vpop.f32.mrf.mxu0
    %v1158 = vadd.f32 0.0, %v1157
    %1159 = vmatmul.f32.gmra.mxu0 %v1031
    %v1160 = vpop.f32.mrf.mxu0
    %v1161 = vadd.f32 0.0, %v1160
    %1162 = vmatmul.f32.gmra.mxu0 %v1034
    %v1163 = vpop.f32.mrf.mxu0
    %v1164 = vadd.f32 0.0, %v1163
    %1165 = vdwg.mxu0
    %v1166 = vsub.f32 %v115, %v876
    %v1167 = vsub.f32 %v180, %v941
    %v1168 = vsub.f32 %v118, %v879
    %v1169 = vsub.f32 %v183, %v944
    %v1170 = vsub.f32 %v121, %v882
    %v1171 = vsub.f32 %v186, %v947
    %v1172 = vsub.f32 %v124, %v885
    %v1173 = vsub.f32 %v189, %v950
    %v1174 = vsub.f32 %v127, %v888
    %v1175 = vsub.f32 %v192, %v953
    %v1176 = vsub.f32 %v130, %v891
    %v1177 = vsub.f32 %v195, %v956
    %v1178 = vsub.f32 %v133, %v894
    %v1179 = vsub.f32 %v198, %v959
    %v1180 = vsub.f32 %v136, %v897
    %v1181 = vsub.f32 %v201, %v962
    %v1182 = vsub.f32 %v139, %v900
    %v1183 = vsub.f32 %v204, %v965
    %v1184 = vsub.f32 %v142, %v903
    %v1185 = vsub.f32 %v207, %v968
    %v1186 = vsub.f32 %v145, %v906
    %v1187 = vsub.f32 %v210, %v971
    %v1188 = vsub.f32 %v148, %v909
    %v1189 = vsub.f32 %v213, %v974
    %v1190 = vsub.f32 %v151, %v912
    %v1191 = vsub.f32 %v216, %v977
    %v1192 = vsub.f32 %v154, %v915
    %v1193 = vsub.f32 %v219, %v980
    %v1194 = vsub.f32 %v157, %v918
    %v1195 = vsub.f32 %v222, %v983
    %v1196 = vsub.f32 %v160, %v921
    %v1197 = vsub.f32 %v225, %v986
    %v1198 = vmul.f32 %v1166, %v1054
    %v1199 = vmul.f32 %v1167, %v1119
    %v1200 = vmul.f32 %v1168, %v1057
    %v1201 = vmul.f32 %v1169, %v1122
    %v1202 = vmul.f32 %v1170, %v1060
    %v1203 = vmul.f32 %v1171, %v1125
    %v1204 = vmul.f32 %v1172, %v1063
    %v1205 = vmul.f32 %v1173, %v1128
    %v1206 = vmul.f32 %v1174, %v1066
    %v1207 = vmul.f32 %v1175, %v1131
    %v1208 = vmul.f32 %v1176, %v1069
    %v1209 = vmul.f32 %v1177, %v1134
    %v1210 = vmul.f32 %v1178, %v1072
    %v1211 = vmul.f32 %v1179, %v1137
    %v1212 = vmul.f32 %v1180, %v1075
    %v1213 = vmul.f32 %v1181, %v1140
    %v1214 = vmul.f32 %v1182, %v1078
    %v1215 = vmul.f32 %v1183, %v1143
    %v1216 = vmul.f32 %v1184, %v1081
    %v1217 = vmul.f32 %v1185, %v1146
    %v1218 = vmul.f32 %v1186, %v1084
    %v1219 = vmul.f32 %v1187, %v1149
    %v1220 = vmul.f32 %v1188, %v1087
    %v1221 = vmul.f32 %v1189, %v1152
    %v1222 = vmul.f32 %v1190, %v1090
    %v1223 = vmul.f32 %v1191, %v1155
    %v1224 = vmul.f32 %v1192, %v1093
    %v1225 = vmul.f32 %v1193, %v1158
    %v1226 = vmul.f32 %v1194, %v1096
    %v1227 = vmul.f32 %v1195, %v1161
    %v1228 = vmul.f32 %v1196, %v1099
    %v1229 = vmul.f32 %v1197, %v1164
    %v1230 = vld [vmem:[%s4] sm:$0x3]
    %v1232 = vperm.slane %v1230, 0
    %v1233 = vperm.slane %v1230, 1
    %v1236 = vmul.f32 %v1198, %v1232
    %v1237 = vmul.f32 %v1199, %v1233
    %v1238 = vmul.f32 %v1200, %v1232
    %v1239 = vmul.f32 %v1201, %v1233
    %v1240 = vmul.f32 %v1202, %v1232
    %v1241 = vmul.f32 %v1203, %v1233
    %v1242 = vmul.f32 %v1204, %v1232
    %v1243 = vmul.f32 %v1205, %v1233
    %v1244 = vmul.f32 %v1206, %v1232
    %v1245 = vmul.f32 %v1207, %v1233
    %v1246 = vmul.f32 %v1208, %v1232
    %v1247 = vmul.f32 %v1209, %v1233
    %v1248 = vmul.f32 %v1210, %v1232
    %v1249 = vmul.f32 %v1211, %v1233
    %v1250 = vmul.f32 %v1212, %v1232
    %v1251 = vmul.f32 %v1213, %v1233
    %v1252 = vmul.f32 %v1214, %v1232
    %v1253 = vmul.f32 %v1215, %v1233
    %v1254 = vmul.f32 %v1216, %v1232
    %v1255 = vmul.f32 %v1217, %v1233
    %v1256 = vmul.f32 %v1218, %v1232
    %v1257 = vmul.f32 %v1219, %v1233
    %v1258 = vmul.f32 %v1220, %v1232
    %v1259 = vmul.f32 %v1221, %v1233
    %v1260 = vmul.f32 %v1222, %v1232
    %v1261 = vmul.f32 %v1223, %v1233
    %v1262 = vmul.f32 %v1224, %v1232
    %v1263 = vmul.f32 %v1225, %v1233
    %v1264 = vmul.f32 %v1226, %v1232
    %v1265 = vmul.f32 %v1227, %v1233
    %v1266 = vmul.f32 %v1228, %v1232
    %v1267 = vmul.f32 %v1229, %v1233
    %v1268 = vld [vmem:[%s5] sm:$0x3]
    %v1270 = vperm.slane %v1268, 0
    %v1271 = vperm.slane %v1268, 1
    %v1274 = vadd.f32 %v1236, %v1270
    %v1275 = vadd.f32 %v1237, %v1271
    %v1276 = vadd.f32 %v1238, %v1270
    %v1277 = vadd.f32 %v1239, %v1271
    %v1278 = vadd.f32 %v1240, %v1270
    %v1279 = vadd.f32 %v1241, %v1271
    %v1280 = vadd.f32 %v1242, %v1270
    %v1281 = vadd.f32 %v1243, %v1271
    %v1282 = vadd.f32 %v1244, %v1270
    %v1283 = vadd.f32 %v1245, %v1271
    %v1284 = vadd.f32 %v1246, %v1270
    %v1285 = vadd.f32 %v1247, %v1271
    %v1286 = vadd.f32 %v1248, %v1270
    %v1287 = vadd.f32 %v1249, %v1271
    %v1288 = vadd.f32 %v1250, %v1270
    %v1289 = vadd.f32 %v1251, %v1271
    %v1290 = vadd.f32 %v1252, %v1270
    %v1291 = vadd.f32 %v1253, %v1271
    %v1292 = vadd.f32 %v1254, %v1270
    %v1293 = vadd.f32 %v1255, %v1271
    %v1294 = vadd.f32 %v1256, %v1270
    %v1295 = vadd.f32 %v1257, %v1271
    %v1296 = vadd.f32 %v1258, %v1270
    %v1297 = vadd.f32 %v1259, %v1271
    %v1298 = vadd.f32 %v1260, %v1270
    %v1299 = vadd.f32 %v1261, %v1271
    %v1300 = vadd.f32 %v1262, %v1270
    %v1301 = vadd.f32 %v1263, %v1271
    %v1302 = vadd.f32 %v1264, %v1270
    %v1303 = vadd.f32 %v1265, %v1271
    %v1304 = vadd.f32 %v1266, %v1270
    %v1305 = vadd.f32 %v1267, %v1271
    %1306 = vst [vmem:[#allocation2] sm:$0xff] %v1274
    %1307 = vst [vmem:[#allocation2 + $0x8] sm:$0xff] %v1275
    %1308 = vst [vmem:[#allocation2 + $0x10] sm:$0xff] %v1276
    %1309 = vst [vmem:[#allocation2 + $0x18] sm:$0xff] %v1277
    %1310 = vst [vmem:[#allocation2 + $0x20] sm:$0xff] %v1278
    %1311 = vst [vmem:[#allocation2 + $0x28] sm:$0xff] %v1279
    %1312 = vst [vmem:[#allocation2 + $0x30] sm:$0xff] %v1280
    %1313 = vst [vmem:[#allocation2 + $0x38] sm:$0xff] %v1281
    %1314 = vst [vmem:[#allocation2 + $0x40] sm:$0xff] %v1282
    %1315 = vst [vmem:[#allocation2 + $0x48] sm:$0xff] %v1283
    %1316 = vst [vmem:[#allocation2 + $0x50] sm:$0xff] %v1284
    %1317 = vst [vmem:[#allocation2 + $0x58] sm:$0xff] %v1285
    %1318 = vst [vmem:[#allocation2 + $0x60] sm:$0xff] %v1286
    %1319 = vst [vmem:[#allocation2 + $0x68] sm:$0xff] %v1287
    %1320 = vst [vmem:[#allocation2 + $0x70] sm:$0xff] %v1288
    %1321 = vst [vmem:[#allocation2 + $0x78] sm:$0xff] %v1289
    %1322 = vst [vmem:[#allocation2 + $0x80] sm:$0xff] %v1290
    %1323 = vst [vmem:[#allocation2 + $0x88] sm:$0xff] %v1291
    %1324 = vst [vmem:[#allocation2 + $0x90] sm:$0xff] %v1292
    %1325 = vst [vmem:[#allocation2 + $0x98] sm:$0xff] %v1293
    %1326 = vst [vmem:[#allocation2 + $0xa0] sm:$0xff] %v1294
    %1327 = vst [vmem:[#allocation2 + $0xa8] sm:$0xff] %v1295
    %1328 = vst [vmem:[#allocation2 + $0xb0] sm:$0xff] %v1296
    %1329 = vst [vmem:[#allocation2 + $0xb8] sm:$0xff] %v1297
    %1330 = vst [vmem:[#allocation2 + $0xc0] sm:$0xff] %v1298
    %1331 = vst [vmem:[#allocation2 + $0xc8] sm:$0xff] %v1299
    %1332 = vst [vmem:[#allocation2 + $0xd0] sm:$0xff] %v1300
    %1333 = vst [vmem:[#allocation2 + $0xd8] sm:$0xff] %v1301
    %1334 = vst [vmem:[#allocation2 + $0xe0] sm:$0xff] %v1302
    %1335 = vst [vmem:[#allocation2 + $0xe8] sm:$0xff] %v1303
    %1336 = vst [vmem:[#allocation2 + $0xf0] sm:$0xff] %v1304
    %1337 = vst [vmem:[#allocation2 + $0xf8] sm:$0xff] %v1305
    // Predicated region
    $region26: #{tpu_custom_call.1} parent=1 // pred_check
      _
    $region27: #{tpu_custom_call.1} parent=1 // pred_check_branch
      %1339 = sbr.rel (0) target = $region29
    $region28: #{tpu_custom_call.1} parent=1 // pred_region
      %1341 = vsyncadd [#allocation3], 0
      %s1342 = sshll.u32 [#allocation2], 4
      %s1343 = int_to_ptr.vmem [resolvable:$true] %s1342
      %s1344 = sshll.u32 %s6, 4
      %s1345 = int_to_ptr.hbm [resolvable:$true] %s1344
      %1350 = dma.vmem_to_hbm [thread:$0]  %s1343, 4096, %s1345, [#allocation3], 256, 256, 16
    $region29: #{tpu_custom_call.1} parent=1 // pred_fallthru
      _
    // Predicated region
    $region30: #{tpu_custom_call.1} parent=1 // pred_check
      _
    $region31: #{tpu_custom_call.1} parent=1 // pred_check_branch
      %1352 = sbr.rel (0) target = $region33
    $region32: #{tpu_custom_call.1} parent=1 // pred_region
      %1354 = dma.done [#allocation3], 4096
    $region33: #{tpu_custom_call.1} parent=1 // pred_fallthru
      _
    %1355 = vsyncpa [#allocation3], 1

// kernel: tpu_custom_call.1
$region0: #{tpu_custom_call.1}
  #allocation0 [shape = 'u32[]', space=smem, size = 0x4, offset = 0x4, fixed_abs, tag = 'smem constant byte address 0x4 - core index']
  #allocation1 [shape = 'u32[72,128]{1,0:T(1,128)}', space=vmem, size = 0x9000, scoped, tag = 'internal scratch']
  %s0 = inlined_call_operand.vmem [shape: f32[128,32], index: 0, kind: input, shape index: {}]
  %s1 = inlined_call_operand.vmem [shape: f32[32,256], index: 1, kind: input, shape index: {}]
  %s2 = inlined_call_operand.vmem [shape: f32[256,8], index: 2, kind: input, shape index: {}]
  %s3 = inlined_call_operand.vmem [shape: f32[8,256], index: 3, kind: input, shape index: {}]
  %s4 = inlined_call_operand.vmem [shape: f32[1,256], index: 4, kind: input, shape index: {}]
  %s5 = inlined_call_operand.vmem [shape: f32[1,256], index: 5, kind: input, shape index: {}]
  %s6 = inlined_call_operand.hbm [shape: f32[128,256], index: 6, kind: output, shape index: {}]
  %s7 = sld [smem:[#allocation0]]
  $region34: #{tpu_custom_call.1} parent=0
    _
  %s9 = ssub.s32 1, %s7
  %s10 = scalar_select 0, %s9, %s7
  $region1: #{tpu_custom_call.1} parent=0
    #allocation2 [shape = 'u8[131072]{0}', space=vmem, size = 0x20000, scoped, tag = 'output window, operand 0, single buffered']
    #allocation3 [shape = 's32[1]{0}', space=sflag, size = 0x4, scoped, tag = 'scoped memory for tpu_custom_call.1']
    %11 = vsyncpa [#allocation3], 0
    // Predicated region
    $region2: #{tpu_custom_call.1} parent=1 // pred_check
      _
    $region3: #{tpu_custom_call.1} parent=1 // pred_check_branch
      %13 = sbr.rel (0) target = $region5
    $region4: #{tpu_custom_call.1} parent=1 // pred_region
      _
    $region5: #{tpu_custom_call.1} parent=1 // pred_fallthru
      _
    // Predicated region
    $region6: #{tpu_custom_call.1} parent=1 // pred_check
      _
    $region7: #{tpu_custom_call.1} parent=1 // pred_check_branch
      %15 = sbr.rel (0) target = $region9
    $region8: #{tpu_custom_call.1} parent=1 // pred_region
      _
    $region9: #{tpu_custom_call.1} parent=1 // pred_fallthru
      _
    // Predicated region
    $region10: #{tpu_custom_call.1} parent=1 // pred_check
      _
    $region11: #{tpu_custom_call.1} parent=1 // pred_check_branch
      %17 = sbr.rel (0) target = $region13
    $region12: #{tpu_custom_call.1} parent=1 // pred_region
      _
    $region13: #{tpu_custom_call.1} parent=1 // pred_fallthru
      _
    // Predicated region
    $region14: #{tpu_custom_call.1} parent=1 // pred_check
      _
    $region15: #{tpu_custom_call.1} parent=1 // pred_check_branch
      %19 = sbr.rel (0) target = $region17
    $region16: #{tpu_custom_call.1} parent=1 // pred_region
      _
    $region17: #{tpu_custom_call.1} parent=1 // pred_fallthru
      _
    // Predicated region
    $region18: #{tpu_custom_call.1} parent=1 // pred_check
      _
    $region19: #{tpu_custom_call.1} parent=1 // pred_check_branch
      %21 = sbr.rel (0) target = $region21
    $region20: #{tpu_custom_call.1} parent=1 // pred_region
      _
    $region21: #{tpu_custom_call.1} parent=1 // pred_fallthru
      _
    // Predicated region
    $region22: #{tpu_custom_call.1} parent=1 // pred_check
      _
    $region23: #{tpu_custom_call.1} parent=1 // pred_check_branch
      %23 = sbr.rel (0) target = $region25
    $region24: #{tpu_custom_call.1} parent=1 // pred_region
      _
    $region25: #{tpu_custom_call.1} parent=1 // pred_fallthru
      _
    %v24 = vld [vmem:[%s0] sm:$0xff]
    %v25 = vld [vmem:[%s0 + $0x8] sm:$0xff]
    %v26 = vld [vmem:[%s0 + $0x10] sm:$0xff]
    %v27 = vld [vmem:[%s0 + $0x18] sm:$0xff]
    %v28 = vld [vmem:[%s0 + $0x20] sm:$0xff]
    %v29 = vld [vmem:[%s0 + $0x28] sm:$0xff]
    %v30 = vld [vmem:[%s0 + $0x30] sm:$0xff]
    %v31 = vld [vmem:[%s0 + $0x38] sm:$0xff]
    %v32 = vld [vmem:[%s0 + $0x40] sm:$0xff]
    %v33 = vld [vmem:[%s0 + $0x48] sm:$0xff]
    %v34 = vld [vmem:[%s0 + $0x50] sm:$0xff]
    %v35 = vld [vmem:[%s0 + $0x58] sm:$0xff]
    %v36 = vld [vmem:[%s0 + $0x60] sm:$0xff]
    %v37 = vld [vmem:[%s0 + $0x68] sm:$0xff]
    %v38 = vld [vmem:[%s0 + $0x70] sm:$0xff]
    %v39 = vld [vmem:[%s0 + $0x78] sm:$0xff]
    %v40 = vld [vmem:[%s1] sm:$0xff]
    %v41 = vld [vmem:[%s1 + $0x8] sm:$0xff]
    %v42 = vld [vmem:[%s1 + $0x10] sm:$0xff]
    %v43 = vld [vmem:[%s1 + $0x18] sm:$0xff]
    %v44 = vld [vmem:[%s1 + $0x20] sm:$0xff]
    %v45 = vld [vmem:[%s1 + $0x28] sm:$0xff]
    %v46 = vld [vmem:[%s1 + $0x30] sm:$0xff]
    %v47 = vld [vmem:[%s1 + $0x38] sm:$0xff]
    %vm48 = vcmask 261120
    %v50 = vsel %vm48, %v24, 0
    %v53 = vsel %vm48, %v25, 0
    %v56 = vsel %vm48, %v26, 0
    %v59 = vsel %vm48, %v27, 0
    %v62 = vsel %vm48, %v28, 0
    %v65 = vsel %vm48, %v29, 0
    %v68 = vsel %vm48, %v30, 0
    %v71 = vsel %vm48, %v31, 0
    %v74 = vsel %vm48, %v32, 0
    %v77 = vsel %vm48, %v33, 0
    %v80 = vsel %vm48, %v34, 0
    %v83 = vsel %vm48, %v35, 0
    %v86 = vsel %vm48, %v36, 0
    %v89 = vsel %vm48, %v37, 0
    %v92 = vsel %vm48, %v38, 0
    %v95 = vsel %vm48, %v39, 0
    %97 = vmatpush.msra.mxu0 0.0
    %98 = vmatpush.msra.mxu0 0.0
    %99 = vmatpush.msra.mxu0 0.0
    %100 = vmatpush.msra.mxu0 0.0
    %101 = vmatpush.msra.mxu0 0.0
    %102 = vmatpush.msra.mxu0 0.0
    %103 = vmatpush.msra.mxu0 0.0
    %104 = vmatpush.msra.mxu0 0.0
    %105 = vmatpush.msra.mxu0 0.0
    %106 = vmatpush.msra.mxu0 0.0
    %107 = vmatpush.msra.mxu0 0.0
    %108 = vmatpush.msra.mxu0 0.0
    %109 = vmatpush.msra.mxu0 %v46
    %110 = vmatpush.msra.mxu0 %v44
    %111 = vmatpush.msra.mxu0 %v42
    %112 = vmatpush.msra.mxu0 %v40
    %113 = vmatmul.f32.gmra.mxu0 %v50
    %v114 = vpop.f32.mrf.mxu0
    %v115 = vadd.f32 0.0, %v114
    %116 = vmatmul.f32.gmra.mxu0 %v53
    %v117 = vpop.f32.mrf.mxu0
    %v118 = vadd.f32 0.0, %v117
    %119 = vmatmul.f32.gmra.mxu0 %v56
    %v120 = vpop.f32.mrf.mxu0
    %v121 = vadd.f32 0.0, %v120
    %122 = vmatmul.f32.gmra.mxu0 %v59
    %v123 = vpop.f32.mrf.mxu0
    %v124 = vadd.f32 0.0, %v123
    %125 = vmatmul.f32.gmra.mxu0 %v62
    %v126 = vpop.f32.mrf.mxu0
    %v127 = vadd.f32 0.0, %v126
    %128 = vmatmul.f32.gmra.mxu0 %v65
    %v129 = vpop.f32.mrf.mxu0
    %v130 = vadd.f32 0.0, %v129
    %131 = vmatmul.f32.gmra.mxu0 %v68
    %v132 = vpop.f32.mrf.mxu0
    %v133 = vadd.f32 0.0, %v132
    %134 = vmatmul.f32.gmra.mxu0 %v71
    %v135 = vpop.f32.mrf.mxu0
    %v136 = vadd.f32 0.0, %v135
    %137 = vmatmul.f32.gmra.mxu0 %v74
    %v138 = vpop.f32.mrf.mxu0
    %v139 = vadd.f32 0.0, %v138
    %140 = vmatmul.f32.gmra.mxu0 %v77
    %v141 = vpop.f32.mrf.mxu0
    %v142 = vadd.f32 0.0, %v141
    %143 = vmatmul.f32.gmra.mxu0 %v80
    %v144 = vpop.f32.mrf.mxu0
    %v145 = vadd.f32 0.0, %v144
    %146 = vmatmul.f32.gmra.mxu0 %v83
    %v147 = vpop.f32.mrf.mxu0
    %v148 = vadd.f32 0.0, %v147
    %149 = vmatmul.f32.gmra.mxu0 %v86
    %v150 = vpop.f32.mrf.mxu0
    %v151 = vadd.f32 0.0, %v150
    %152 = vmatmul.f32.gmra.mxu0 %v89
    %v153 = vpop.f32.mrf.mxu0
    %v154 = vadd.f32 0.0, %v153
    %155 = vmatmul.f32.gmra.mxu0 %v92
    %v156 = vpop.f32.mrf.mxu0
    %v157 = vadd.f32 0.0, %v156
    %158 = vmatmul.f32.gmra.mxu0 %v95
    %v159 = vpop.f32.mrf.mxu0
    %v160 = vadd.f32 0.0, %v159
    %161 = vdwg.mxu0
    %162 = vmatpush.msra.mxu0 0.0
    %163 = vmatpush.msra.mxu0 0.0
    %164 = vmatpush.msra.mxu0 0.0
    %165 = vmatpush.msra.mxu0 0.0
    %166 = vmatpush.msra.mxu0 0.0
    %167 = vmatpush.msra.mxu0 0.0
    %168 = vmatpush.msra.mxu0 0.0
    %169 = vmatpush.msra.mxu0 0.0
    %170 = vmatpush.msra.mxu0 0.0
    %171 = vmatpush.msra.mxu0 0.0
    %172 = vmatpush.msra.mxu0 0.0
    %173 = vmatpush.msra.mxu0 0.0
    %174 = vmatpush.msra.mxu0 %v47
    %175 = vmatpush.msra.mxu0 %v45
    %176 = vmatpush.msra.mxu0 %v43
    %177 = vmatpush.msra.mxu0 %v41
    %178 = vmatmul.f32.gmra.mxu0 %v50
    %v179 = vpop.f32.mrf.mxu0
    %v180 = vadd.f32 0.0, %v179
    %181 = vmatmul.f32.gmra.mxu0 %v53
    %v182 = vpop.f32.mrf.mxu0
    %v183 = vadd.f32 0.0, %v182
    %184 = vmatmul.f32.gmra.mxu0 %v56
    %v185 = vpop.f32.mrf.mxu0
    %v186 = vadd.f32 0.0, %v185
    %187 = vmatmul.f32.gmra.mxu0 %v59
    %v188 = vpop.f32.mrf.mxu0
    %v189 = vadd.f32 0.0, %v188
    %190 = vmatmul.f32.gmra.mxu0 %v62
    %v191 = vpop.f32.mrf.mxu0
    %v192 = vadd.f32 0.0, %v191
    %193 = vmatmul.f32.gmra.mxu0 %v65
    %v194 = vpop.f32.mrf.mxu0
    %v195 = vadd.f32 0.0, %v194
    %196 = vmatmul.f32.gmra.mxu0 %v68
    %v197 = vpop.f32.mrf.mxu0
    %v198 = vadd.f32 0.0, %v197
    %199 = vmatmul.f32.gmra.mxu0 %v71
    %v200 = vpop.f32.mrf.mxu0
    %v201 = vadd.f32 0.0, %v200
    %202 = vmatmul.f32.gmra.mxu0 %v74
    %v203 = vpop.f32.mrf.mxu0
    %v204 = vadd.f32 0.0, %v203
    %205 = vmatmul.f32.gmra.mxu0 %v77
    %v206 = vpop.f32.mrf.mxu0
    %v207 = vadd.f32 0.0, %v206
    %208 = vmatmul.f32.gmra.mxu0 %v80
    %v209 = vpop.f32.mrf.mxu0
    %v210 = vadd.f32 0.0, %v209
    %211 = vmatmul.f32.gmra.mxu0 %v83
    %v212 = vpop.f32.mrf.mxu0
    %v213 = vadd.f32 0.0, %v212
    %214 = vmatmul.f32.gmra.mxu0 %v86
    %v215 = vpop.f32.mrf.mxu0
    %v216 = vadd.f32 0.0, %v215
    %217 = vmatmul.f32.gmra.mxu0 %v89
    %v218 = vpop.f32.mrf.mxu0
    %v219 = vadd.f32 0.0, %v218
    %220 = vmatmul.f32.gmra.mxu0 %v92
    %v221 = vpop.f32.mrf.mxu0
    %v222 = vadd.f32 0.0, %v221
    %223 = vmatmul.f32.gmra.mxu0 %v95
    %v224 = vpop.f32.mrf.mxu0
    %v225 = vadd.f32 0.0, %v224
    %226 = vdwg.mxu0
    %v227 = vld [vmem:[%s2] sm:$0xff]
    %v228 = vld [vmem:[%s2 + $0x8] sm:$0xff]
    %v229 = vld [vmem:[%s2 + $0x10] sm:$0xff]
    %v230 = vld [vmem:[%s2 + $0x18] sm:$0xff]
    %v231 = vld [vmem:[%s2 + $0x20] sm:$0xff]
    %v232 = vld [vmem:[%s2 + $0x28] sm:$0xff]
    %v233 = vld [vmem:[%s2 + $0x30] sm:$0xff]
    %v234 = vld [vmem:[%s2 + $0x38] sm:$0xff]
    %v235 = vld [vmem:[%s2 + $0x40] sm:$0xff]
    %v236 = vld [vmem:[%s2 + $0x48] sm:$0xff]
    %v237 = vld [vmem:[%s2 + $0x50] sm:$0xff]
    %v238 = vld [vmem:[%s2 + $0x58] sm:$0xff]
    %v239 = vld [vmem:[%s2 + $0x60] sm:$0xff]
    %v240 = vld [vmem:[%s2 + $0x68] sm:$0xff]
    %v241 = vld [vmem:[%s2 + $0x70] sm:$0xff]
    %v242 = vld [vmem:[%s2 + $0x78] sm:$0xff]
    %v243 = vld [vmem:[%s2 + $0x80] sm:$0xff]
    %v244 = vld [vmem:[%s2 + $0x88] sm:$0xff]
    %v245 = vld [vmem:[%s2 + $0x90] sm:$0xff]
    %v246 = vld [vmem:[%s2 + $0x98] sm:$0xff]
    %v247 = vld [vmem:[%s2 + $0xa0] sm:$0xff]
    %v248 = vld [vmem:[%s2 + $0xa8] sm:$0xff]
    %v249 = vld [vmem:[%s2 + $0xb0] sm:$0xff]
    %v250 = vld [vmem:[%s2 + $0xb8] sm:$0xff]
    %v251 = vld [vmem:[%s2 + $0xc0] sm:$0xff]
    %v252 = vld [vmem:[%s2 + $0xc8] sm:$0xff]
    %v253 = vld [vmem:[%s2 + $0xd0] sm:$0xff]
    %v254 = vld [vmem:[%s2 + $0xd8] sm:$0xff]
    %v255 = vld [vmem:[%s2 + $0xe0] sm:$0xff]
    %v256 = vld [vmem:[%s2 + $0xe8] sm:$0xff]
    %v257 = vld [vmem:[%s2 + $0xf0] sm:$0xff]
    %v258 = vld [vmem:[%s2 + $0xf8] sm:$0xff]
    %259 = vmatpush.msra.mxu0 %v242
    %260 = vmatpush.msra.mxu0 %v241
    %261 = vmatpush.msra.mxu0 %v240
    %262 = vmatpush.msra.mxu0 %v239
    %263 = vmatpush.msra.mxu0 %v238
    %264 = vmatpush.msra.mxu0 %v237
    %265 = vmatpush.msra.mxu0 %v236
    %266 = vmatpush.msra.mxu0 %v235
    %267 = vmatpush.msra.mxu0 %v234
    %268 = vmatpush.msra.mxu0 %v233
    %269 = vmatpush.msra.mxu0 %v232
    %270 = vmatpush.msra.mxu0 %v231
    %271 = vmatpush.msra.mxu0 %v230
    %272 = vmatpush.msra.mxu0 %v229
    %273 = vmatpush.msra.mxu0 %v228
    %274 = vmatpush.msra.mxu0 %v227
    %275 = vmatmul.f32.gmra.mxu0 %v115
    %v276 = vpop.f32.mrf.mxu0
    %v277 = vadd.f32 0.0, %v276
    %278 = vmatmul.f32.gmra.mxu0 %v118
    %v279 = vpop.f32.mrf.mxu0
    %v280 = vadd.f32 0.0, %v279
    %281 = vmatmul.f32.gmra.mxu0 %v121
    %v282 = vpop.f32.mrf.mxu0
    %v283 = vadd.f32 0.0, %v282
    %284 = vmatmul.f32.gmra.mxu0 %v124
    %v285 = vpop.f32.mrf.mxu0
    %v286 = vadd.f32 0.0, %v285
    %287 = vmatmul.f32.gmra.mxu0 %v127
    %v288 = vpop.f32.mrf.mxu0
    %v289 = vadd.f32 0.0, %v288
    %290 = vmatmul.f32.gmra.mxu0 %v130
    %v291 = vpop.f32.mrf.mxu0
    %v292 = vadd.f32 0.0, %v291
    %293 = vmatmul.f32.gmra.mxu0 %v133
    %v294 = vpop.f32.mrf.mxu0
    %v295 = vadd.f32 0.0, %v294
    %296 = vmatmul.f32.gmra.mxu0 %v136
    %v297 = vpop.f32.mrf.mxu0
    %v298 = vadd.f32 0.0, %v297
    %299 = vmatmul.f32.gmra.mxu0 %v139
    %v300 = vpop.f32.mrf.mxu0
    %v301 = vadd.f32 0.0, %v300
    %302 = vmatmul.f32.gmra.mxu0 %v142
    %v303 = vpop.f32.mrf.mxu0
    %v304 = vadd.f32 0.0, %v303
    %305 = vmatmul.f32.gmra.mxu0 %v145
    %v306 = vpop.f32.mrf.mxu0
    %v307 = vadd.f32 0.0, %v306
    %308 = vmatmul.f32.gmra.mxu0 %v148
    %v309 = vpop.f32.mrf.mxu0
    %v310 = vadd.f32 0.0, %v309
    %311 = vmatmul.f32.gmra.mxu0 %v151
    %v312 = vpop.f32.mrf.mxu0
    %v313 = vadd.f32 0.0, %v312
    %314 = vmatmul.f32.gmra.mxu0 %v154
    %v315 = vpop.f32.mrf.mxu0
    %v316 = vadd.f32 0.0, %v315
    %317 = vmatmul.f32.gmra.mxu0 %v157
    %v318 = vpop.f32.mrf.mxu0
    %v319 = vadd.f32 0.0, %v318
    %320 = vmatmul.f32.gmra.mxu0 %v160
    %v321 = vpop.f32.mrf.mxu0
    %v322 = vadd.f32 0.0, %v321
    %323 = vdwg.mxu0
    %324 = vmatpush.msra.mxu0 %v258
    %325 = vmatpush.msra.mxu0 %v257
    %326 = vmatpush.msra.mxu0 %v256
    %327 = vmatpush.msra.mxu0 %v255
    %328 = vmatpush.msra.mxu0 %v254
    %329 = vmatpush.msra.mxu0 %v253
    %330 = vmatpush.msra.mxu0 %v252
    %331 = vmatpush.msra.mxu0 %v251
    %332 = vmatpush.msra.mxu0 %v250
    %333 = vmatpush.msra.mxu0 %v249
    %334 = vmatpush.msra.mxu0 %v248
    %335 = vmatpush.msra.mxu0 %v247
    %336 = vmatpush.msra.mxu0 %v246
    %337 = vmatpush.msra.mxu0 %v245
    %338 = vmatpush.msra.mxu0 %v244
    %339 = vmatpush.msra.mxu0 %v243
    %340 = vmatmul.f32.gmra.mxu0 %v180
    %v341 = vpop.f32.mrf.mxu0
    %v342 = vadd.f32 %v277, %v341
    %343 = vmatmul.f32.gmra.mxu0 %v183
    %v344 = vpop.f32.mrf.mxu0
    %v345 = vadd.f32 %v280, %v344
    %346 = vmatmul.f32.gmra.mxu0 %v186
    %v347 = vpop.f32.mrf.mxu0
    %v348 = vadd.f32 %v283, %v347
    %349 = vmatmul.f32.gmra.mxu0 %v189
    %v350 = vpop.f32.mrf.mxu0
    %v351 = vadd.f32 %v286, %v350
    %352 = vmatmul.f32.gmra.mxu0 %v192
    %v353 = vpop.f32.mrf.mxu0
    %v354 = vadd.f32 %v289, %v353
    %355 = vmatmul.f32.gmra.mxu0 %v195
    %v356 = vpop.f32.mrf.mxu0
    %v357 = vadd.f32 %v292, %v356
    %358 = vmatmul.f32.gmra.mxu0 %v198
    %v359 = vpop.f32.mrf.mxu0
    %v360 = vadd.f32 %v295, %v359
    %361 = vmatmul.f32.gmra.mxu0 %v201
    %v362 = vpop.f32.mrf.mxu0
    %v363 = vadd.f32 %v298, %v362
    %364 = vmatmul.f32.gmra.mxu0 %v204
    %v365 = vpop.f32.mrf.mxu0
    %v366 = vadd.f32 %v301, %v365
    %367 = vmatmul.f32.gmra.mxu0 %v207
    %v368 = vpop.f32.mrf.mxu0
    %v369 = vadd.f32 %v304, %v368
    %370 = vmatmul.f32.gmra.mxu0 %v210
    %v371 = vpop.f32.mrf.mxu0
    %v372 = vadd.f32 %v307, %v371
    %373 = vmatmul.f32.gmra.mxu0 %v213
    %v374 = vpop.f32.mrf.mxu0
    %v375 = vadd.f32 %v310, %v374
    %376 = vmatmul.f32.gmra.mxu0 %v216
    %v377 = vpop.f32.mrf.mxu0
    %v378 = vadd.f32 %v313, %v377
    %379 = vmatmul.f32.gmra.mxu0 %v219
    %v380 = vpop.f32.mrf.mxu0
    %v381 = vadd.f32 %v316, %v380
    %382 = vmatmul.f32.gmra.mxu0 %v222
    %v383 = vpop.f32.mrf.mxu0
    %v384 = vadd.f32 %v319, %v383
    %385 = vmatmul.f32.gmra.mxu0 %v225
    %v386 = vpop.f32.mrf.mxu0
    %v387 = vadd.f32 %v322, %v386
    %388 = vdwg.mxu0
    %v389 = vmul.f32 %v342, 0.03125
    %v390 = vmul.f32 %v345, 0.03125
    %v391 = vmul.f32 %v348, 0.03125
    %v392 = vmul.f32 %v351, 0.03125
    %v393 = vmul.f32 %v354, 0.03125
    %v394 = vmul.f32 %v357, 0.03125
    %v395 = vmul.f32 %v360, 0.03125
    %v396 = vmul.f32 %v363, 0.03125
    %v397 = vmul.f32 %v366, 0.03125
    %v398 = vmul.f32 %v369, 0.03125
    %v399 = vmul.f32 %v372, 0.03125
    %v400 = vmul.f32 %v375, 0.03125
    %v401 = vmul.f32 %v378, 0.03125
    %v402 = vmul.f32 %v381, 0.03125
    %v403 = vmul.f32 %v384, 0.03125
    %v404 = vmul.f32 %v387, 0.03125
    %v405 = vmul.f32 %v115, %v115
    %v406 = vmul.f32 %v180, %v180
    %v407 = vmul.f32 %v118, %v118
    %v408 = vmul.f32 %v183, %v183
    %v409 = vmul.f32 %v121, %v121
    %v410 = vmul.f32 %v186, %v186
    %v411 = vmul.f32 %v124, %v124
    %v412 = vmul.f32 %v189, %v189
    %v413 = vmul.f32 %v127, %v127
    %v414 = vmul.f32 %v192, %v192
    %v415 = vmul.f32 %v130, %v130
    %v416 = vmul.f32 %v195, %v195
    %v417 = vmul.f32 %v133, %v133
    %v418 = vmul.f32 %v198, %v198
    %v419 = vmul.f32 %v136, %v136
    %v420 = vmul.f32 %v201, %v201
    %v421 = vmul.f32 %v139, %v139
    %v422 = vmul.f32 %v204, %v204
    %v423 = vmul.f32 %v142, %v142
    %v424 = vmul.f32 %v207, %v207
    %v425 = vmul.f32 %v145, %v145
    %v426 = vmul.f32 %v210, %v210
    %v427 = vmul.f32 %v148, %v148
    %v428 = vmul.f32 %v213, %v213
    %v429 = vmul.f32 %v151, %v151
    %v430 = vmul.f32 %v216, %v216
    %v431 = vmul.f32 %v154, %v154
    %v432 = vmul.f32 %v219, %v219
    %v433 = vmul.f32 %v157, %v157
    %v434 = vmul.f32 %v222, %v222
    %v435 = vmul.f32 %v160, %v160
    %v436 = vmul.f32 %v225, %v225
    %437 = vmatpush.msra.mxu0 %v242
    %438 = vmatpush.msra.mxu0 %v241
    %439 = vmatpush.msra.mxu0 %v240
    %440 = vmatpush.msra.mxu0 %v239
    %441 = vmatpush.msra.mxu0 %v238
    %442 = vmatpush.msra.mxu0 %v237
    %443 = vmatpush.msra.mxu0 %v236
    %444 = vmatpush.msra.mxu0 %v235
    %445 = vmatpush.msra.mxu0 %v234
    %446 = vmatpush.msra.mxu0 %v233
    %447 = vmatpush.msra.mxu0 %v232
    %448 = vmatpush.msra.mxu0 %v231
    %449 = vmatpush.msra.mxu0 %v230
    %450 = vmatpush.msra.mxu0 %v229
    %451 = vmatpush.msra.mxu0 %v228
    %452 = vmatpush.msra.mxu0 %v227
    %453 = vmatmul.f32.gmra.mxu0 %v405
    %v454 = vpop.f32.mrf.mxu0
    %v455 = vadd.f32 0.0, %v454
    %456 = vmatmul.f32.gmra.mxu0 %v407
    %v457 = vpop.f32.mrf.mxu0
    %v458 = vadd.f32 0.0, %v457
    %459 = vmatmul.f32.gmra.mxu0 %v409
    %v460 = vpop.f32.mrf.mxu0
    %v461 = vadd.f32 0.0, %v460
    %462 = vmatmul.f32.gmra.mxu0 %v411
    %v463 = vpop.f32.mrf.mxu0
    %v464 = vadd.f32 0.0, %v463
    %465 = vmatmul.f32.gmra.mxu0 %v413
    %v466 = vpop.f32.mrf.mxu0
    %v467 = vadd.f32 0.0, %v466
    %468 = vmatmul.f32.gmra.mxu0 %v415
    %v469 = vpop.f32.mrf.mxu0
    %v470 = vadd.f32 0.0, %v469
    %471 = vmatmul.f32.gmra.mxu0 %v417
    %v472 = vpop.f32.mrf.mxu0
    %v473 = vadd.f32 0.0, %v472
    %474 = vmatmul.f32.gmra.mxu0 %v419
    %v475 = vpop.f32.mrf.mxu0
    %v476 = vadd.f32 0.0, %v475
    %477 = vmatmul.f32.gmra.mxu0 %v421
    %v478 = vpop.f32.mrf.mxu0
    %v479 = vadd.f32 0.0, %v478
    %480 = vmatmul.f32.gmra.mxu0 %v423
    %v481 = vpop.f32.mrf.mxu0
    %v482 = vadd.f32 0.0, %v481
    %483 = vmatmul.f32.gmra.mxu0 %v425
    %v484 = vpop.f32.mrf.mxu0
    %v485 = vadd.f32 0.0, %v484
    %486 = vmatmul.f32.gmra.mxu0 %v427
    %v487 = vpop.f32.mrf.mxu0
    %v488 = vadd.f32 0.0, %v487
    %489 = vmatmul.f32.gmra.mxu0 %v429
    %v490 = vpop.f32.mrf.mxu0
    %v491 = vadd.f32 0.0, %v490
    %492 = vmatmul.f32.gmra.mxu0 %v431
    %v493 = vpop.f32.mrf.mxu0
    %v494 = vadd.f32 0.0, %v493
    %495 = vmatmul.f32.gmra.mxu0 %v433
    %v496 = vpop.f32.mrf.mxu0
    %v497 = vadd.f32 0.0, %v496
    %498 = vmatmul.f32.gmra.mxu0 %v435
    %v499 = vpop.f32.mrf.mxu0
    %v500 = vadd.f32 0.0, %v499
    %501 = vdwg.mxu0
    %502 = vmatpush.msra.mxu0 %v258
    %503 = vmatpush.msra.mxu0 %v257
    %504 = vmatpush.msra.mxu0 %v256
    %505 = vmatpush.msra.mxu0 %v255
    %506 = vmatpush.msra.mxu0 %v254
    %507 = vmatpush.msra.mxu0 %v253
    %508 = vmatpush.msra.mxu0 %v252
    %509 = vmatpush.msra.mxu0 %v251
    %510 = vmatpush.msra.mxu0 %v250
    %511 = vmatpush.msra.mxu0 %v249
    %512 = vmatpush.msra.mxu0 %v248
    %513 = vmatpush.msra.mxu0 %v247
    %514 = vmatpush.msra.mxu0 %v246
    %515 = vmatpush.msra.mxu0 %v245
    %516 = vmatpush.msra.mxu0 %v244
    %517 = vmatpush.msra.mxu0 %v243
    %518 = vmatmul.f32.gmra.mxu0 %v406
    %v519 = vpop.f32.mrf.mxu0
    %v520 = vadd.f32 %v455, %v519
    %521 = vmatmul.f32.gmra.mxu0 %v408
    %v522 = vpop.f32.mrf.mxu0
    %v523 = vadd.f32 %v458, %v522
    %524 = vmatmul.f32.gmra.mxu0 %v410
    %v525 = vpop.f32.mrf.mxu0
    %v526 = vadd.f32 %v461, %v525
    %527 = vmatmul.f32.gmra.mxu0 %v412
    %v528 = vpop.f32.mrf.mxu0
    %v529 = vadd.f32 %v464, %v528
    %530 = vmatmul.f32.gmra.mxu0 %v414
    %v531 = vpop.f32.mrf.mxu0
    %v532 = vadd.f32 %v467, %v531
    %533 = vmatmul.f32.gmra.mxu0 %v416
    %v534 = vpop.f32.mrf.mxu0
    %v535 = vadd.f32 %v470, %v534
    %536 = vmatmul.f32.gmra.mxu0 %v418
    %v537 = vpop.f32.mrf.mxu0
    %v538 = vadd.f32 %v473, %v537
    %539 = vmatmul.f32.gmra.mxu0 %v420
    %v540 = vpop.f32.mrf.mxu0
    %v541 = vadd.f32 %v476, %v540
    %542 = vmatmul.f32.gmra.mxu0 %v422
    %v543 = vpop.f32.mrf.mxu0
    %v544 = vadd.f32 %v479, %v543
    %545 = vmatmul.f32.gmra.mxu0 %v424
    %v546 = vpop.f32.mrf.mxu0
    %v547 = vadd.f32 %v482, %v546
    %548 = vmatmul.f32.gmra.mxu0 %v426
    %v549 = vpop.f32.mrf.mxu0
    %v550 = vadd.f32 %v485, %v549
    %551 = vmatmul.f32.gmra.mxu0 %v428
    %v552 = vpop.f32.mrf.mxu0
    %v553 = vadd.f32 %v488, %v552
    %554 = vmatmul.f32.gmra.mxu0 %v430
    %v555 = vpop.f32.mrf.mxu0
    %v556 = vadd.f32 %v491, %v555
    %557 = vmatmul.f32.gmra.mxu0 %v432
    %v558 = vpop.f32.mrf.mxu0
    %v559 = vadd.f32 %v494, %v558
    %560 = vmatmul.f32.gmra.mxu0 %v434
    %v561 = vpop.f32.mrf.mxu0
    %v562 = vadd.f32 %v497, %v561
    %563 = vmatmul.f32.gmra.mxu0 %v436
    %v564 = vpop.f32.mrf.mxu0
    %v565 = vadd.f32 %v500, %v564
    %566 = vdwg.mxu0
    %v567 = vmul.f32 %v520, 0.03125
    %v568 = vmul.f32 %v523, 0.03125
    %v569 = vmul.f32 %v526, 0.03125
    %v570 = vmul.f32 %v529, 0.03125
    %v571 = vmul.f32 %v532, 0.03125
    %v572 = vmul.f32 %v535, 0.03125
    %v573 = vmul.f32 %v538, 0.03125
    %v574 = vmul.f32 %v541, 0.03125
    %v575 = vmul.f32 %v544, 0.03125
    %v576 = vmul.f32 %v547, 0.03125
    %v577 = vmul.f32 %v550, 0.03125
    %v578 = vmul.f32 %v553, 0.03125
    %v579 = vmul.f32 %v556, 0.03125
    %v580 = vmul.f32 %v559, 0.03125
    %v581 = vmul.f32 %v562, 0.03125
    %v582 = vmul.f32 %v565, 0.03125
    %v583 = vmul.f32 %v389, %v389
    %v584 = vmul.f32 %v390, %v390
    %v585 = vmul.f32 %v391, %v391
    %v586 = vmul.f32 %v392, %v392
    %v587 = vmul.f32 %v393, %v393
    %v588 = vmul.f32 %v394, %v394
    %v589 = vmul.f32 %v395, %v395
    %v590 = vmul.f32 %v396, %v396
    %v591 = vmul.f32 %v397, %v397
    %v592 = vmul.f32 %v398, %v398
    %v593 = vmul.f32 %v399, %v399
    %v594 = vmul.f32 %v400, %v400
    %v595 = vmul.f32 %v401, %v401
    %v596 = vmul.f32 %v402, %v402
    %v597 = vmul.f32 %v403, %v403
    %v598 = vmul.f32 %v404, %v404
    %v599 = vsub.f32 %v567, %v583
    %v600 = vsub.f32 %v568, %v584
    %v601 = vsub.f32 %v569, %v585
    %v602 = vsub.f32 %v570, %v586
    %v603 = vsub.f32 %v571, %v587
    %v604 = vsub.f32 %v572, %v588
    %v605 = vsub.f32 %v573, %v589
    %v606 = vsub.f32 %v574, %v590
    %v607 = vsub.f32 %v575, %v591
    %v608 = vsub.f32 %v576, %v592
    %v609 = vsub.f32 %v577, %v593
    %v610 = vsub.f32 %v578, %v594
    %v611 = vsub.f32 %v579, %v595
    %v612 = vsub.f32 %v580, %v596
    %v613 = vsub.f32 %v581, %v597
    %v614 = vsub.f32 %v582, %v598
    %v615 = vmax.f32 %v599, 0.0
    %v616 = vmax.f32 %v600, 0.0
    %v617 = vmax.f32 %v601, 0.0
    %v618 = vmax.f32 %v602, 0.0
    %v619 = vmax.f32 %v603, 0.0
    %v620 = vmax.f32 %v604, 0.0
    %v621 = vmax.f32 %v605, 0.0
    %v622 = vmax.f32 %v606, 0.0
    %v623 = vmax.f32 %v607, 0.0
    %v624 = vmax.f32 %v608, 0.0
    %v625 = vmax.f32 %v609, 0.0
    %v626 = vmax.f32 %v610, 0.0
    %v627 = vmax.f32 %v611, 0.0
    %v628 = vmax.f32 %v612, 0.0
    %v629 = vmax.f32 %v613, 0.0
    %v630 = vmax.f32 %v614, 0.0
    %v631 = vadd.f32 %v615, 1e-05
    %v632 = vadd.f32 %v616, 1e-05
    %v633 = vadd.f32 %v617, 1e-05
    %v634 = vadd.f32 %v618, 1e-05
    %v635 = vadd.f32 %v619, 1e-05
    %v636 = vadd.f32 %v620, 1e-05
    %v637 = vadd.f32 %v621, 1e-05
    %v638 = vadd.f32 %v622, 1e-05
    %v639 = vadd.f32 %v623, 1e-05
    %v640 = vadd.f32 %v624, 1e-05
    %v641 = vadd.f32 %v625, 1e-05
    %v642 = vadd.f32 %v626, 1e-05
    %v643 = vadd.f32 %v627, 1e-05
    %v644 = vadd.f32 %v628, 1e-05
    %v645 = vadd.f32 %v629, 1e-05
    %v646 = vadd.f32 %v630, 1e-05
    %v647 = vrsqrt.pop %v631
    %v648 = vmul.f32 %v647, %v631
    %v649 = vmul.f32 %v648, %v647
    %v650 = vmul.f32 0.5, %v649
    %v651 = vsub.f32 1.5, %v650
    %v652 = vmul.f32 %v647, %v651
    %vm653 = vweird.f32 %v631
    %vm654 = vweird.f32 %v647
    %vm655 = vmor %vm653, %vm654
    %v656 = vsel %vm655, %v647, %v652
    %v657 = vrsqrt.pop %v632
    %v658 = vmul.f32 %v657, %v632
    %v659 = vmul.f32 %v658, %v657
    %v660 = vmul.f32 0.5, %v659
    %v661 = vsub.f32 1.5, %v660
    %v662 = vmul.f32 %v657, %v661
    %vm663 = vweird.f32 %v632
    %vm664 = vweird.f32 %v657
    %vm665 = vmor %vm663, %vm664
    %v666 = vsel %vm665, %v657, %v662
    %v667 = vrsqrt.pop %v633
    %v668 = vmul.f32 %v667, %v633
    %v669 = vmul.f32 %v668, %v667
    %v670 = vmul.f32 0.5, %v669
    %v671 = vsub.f32 1.5, %v670
    %v672 = vmul.f32 %v667, %v671
    %vm673 = vweird.f32 %v633
    %vm674 = vweird.f32 %v667
    %vm675 = vmor %vm673, %vm674
    %v676 = vsel %vm675, %v667, %v672
    %v677 = vrsqrt.pop %v634
    %v678 = vmul.f32 %v677, %v634
    %v679 = vmul.f32 %v678, %v677
    %v680 = vmul.f32 0.5, %v679
    %v681 = vsub.f32 1.5, %v680
    %v682 = vmul.f32 %v677, %v681
    %vm683 = vweird.f32 %v634
    %vm684 = vweird.f32 %v677
    %vm685 = vmor %vm683, %vm684
    %v686 = vsel %vm685, %v677, %v682
    %v687 = vrsqrt.pop %v635
    %v688 = vmul.f32 %v687, %v635
    %v689 = vmul.f32 %v688, %v687
    %v690 = vmul.f32 0.5, %v689
    %v691 = vsub.f32 1.5, %v690
    %v692 = vmul.f32 %v687, %v691
    %vm693 = vweird.f32 %v635
    %vm694 = vweird.f32 %v687
    %vm695 = vmor %vm693, %vm694
    %v696 = vsel %vm695, %v687, %v692
    %v697 = vrsqrt.pop %v636
    %v698 = vmul.f32 %v697, %v636
    %v699 = vmul.f32 %v698, %v697
    %v700 = vmul.f32 0.5, %v699
    %v701 = vsub.f32 1.5, %v700
    %v702 = vmul.f32 %v697, %v701
    %vm703 = vweird.f32 %v636
    %vm704 = vweird.f32 %v697
    %vm705 = vmor %vm703, %vm704
    %v706 = vsel %vm705, %v697, %v702
    %v707 = vrsqrt.pop %v637
    %v708 = vmul.f32 %v707, %v637
    %v709 = vmul.f32 %v708, %v707
    %v710 = vmul.f32 0.5, %v709
    %v711 = vsub.f32 1.5, %v710
    %v712 = vmul.f32 %v707, %v711
    %vm713 = vweird.f32 %v637
    %vm714 = vweird.f32 %v707
    %vm715 = vmor %vm713, %vm714
    %v716 = vsel %vm715, %v707, %v712
    %v717 = vrsqrt.pop %v638
    %v718 = vmul.f32 %v717, %v638
    %v719 = vmul.f32 %v718, %v717
    %v720 = vmul.f32 0.5, %v719
    %v721 = vsub.f32 1.5, %v720
    %v722 = vmul.f32 %v717, %v721
    %vm723 = vweird.f32 %v638
    %vm724 = vweird.f32 %v717
    %vm725 = vmor %vm723, %vm724
    %v726 = vsel %vm725, %v717, %v722
    %v727 = vrsqrt.pop %v639
    %v728 = vmul.f32 %v727, %v639
    %v729 = vmul.f32 %v728, %v727
    %v730 = vmul.f32 0.5, %v729
    %v731 = vsub.f32 1.5, %v730
    %v732 = vmul.f32 %v727, %v731
    %vm733 = vweird.f32 %v639
    %vm734 = vweird.f32 %v727
    %vm735 = vmor %vm733, %vm734
    %v736 = vsel %vm735, %v727, %v732
    %v737 = vrsqrt.pop %v640
    %v738 = vmul.f32 %v737, %v640
    %v739 = vmul.f32 %v738, %v737
    %v740 = vmul.f32 0.5, %v739
    %v741 = vsub.f32 1.5, %v740
    %v742 = vmul.f32 %v737, %v741
    %vm743 = vweird.f32 %v640
    %vm744 = vweird.f32 %v737
    %vm745 = vmor %vm743, %vm744
    %v746 = vsel %vm745, %v737, %v742
    %v747 = vrsqrt.pop %v641
    %v748 = vmul.f32 %v747, %v641
    %v749 = vmul.f32 %v748, %v747
    %v750 = vmul.f32 0.5, %v749
    %v751 = vsub.f32 1.5, %v750
    %v752 = vmul.f32 %v747, %v751
    %vm753 = vweird.f32 %v641
    %vm754 = vweird.f32 %v747
    %vm755 = vmor %vm753, %vm754
    %v756 = vsel %vm755, %v747, %v752
    %v757 = vrsqrt.pop %v642
    %v758 = vmul.f32 %v757, %v642
    %v759 = vmul.f32 %v758, %v757
    %v760 = vmul.f32 0.5, %v759
    %v761 = vsub.f32 1.5, %v760
    %v762 = vmul.f32 %v757, %v761
    %vm763 = vweird.f32 %v642
    %vm764 = vweird.f32 %v757
    %vm765 = vmor %vm763, %vm764
    %v766 = vsel %vm765, %v757, %v762
    %v767 = vrsqrt.pop %v643
    %v768 = vmul.f32 %v767, %v643
    %v769 = vmul.f32 %v768, %v767
    %v770 = vmul.f32 0.5, %v769
    %v771 = vsub.f32 1.5, %v770
    %v772 = vmul.f32 %v767, %v771
    %vm773 = vweird.f32 %v643
    %vm774 = vweird.f32 %v767
    %vm775 = vmor %vm773, %vm774
    %v776 = vsel %vm775, %v767, %v772
    %v777 = vrsqrt.pop %v644
    %v778 = vmul.f32 %v777, %v644
    %v779 = vmul.f32 %v778, %v777
    %v780 = vmul.f32 0.5, %v779
    %v781 = vsub.f32 1.5, %v780
    %v782 = vmul.f32 %v777, %v781
    %vm783 = vweird.f32 %v644
    %vm784 = vweird.f32 %v777
    %vm785 = vmor %vm783, %vm784
    %v786 = vsel %vm785, %v777, %v782
    %v787 = vrsqrt.pop %v645
    %v788 = vmul.f32 %v787, %v645
    %v789 = vmul.f32 %v788, %v787
    %v790 = vmul.f32 0.5, %v789
    %v791 = vsub.f32 1.5, %v790
    %v792 = vmul.f32 %v787, %v791
    %vm793 = vweird.f32 %v645
    %vm794 = vweird.f32 %v787
    %vm795 = vmor %vm793, %vm794
    %v796 = vsel %vm795, %v787, %v792
    %v797 = vrsqrt.pop %v646
    %v798 = vmul.f32 %v797, %v646
    %v799 = vmul.f32 %v798, %v797
    %v800 = vmul.f32 0.5, %v799
    %v801 = vsub.f32 1.5, %v800
    %v802 = vmul.f32 %v797, %v801
    %vm803 = vweird.f32 %v646
    %vm804 = vweird.f32 %v797
    %vm805 = vmor %vm803, %vm804
    %v806 = vsel %vm805, %v797, %v802
    %v807 = vld [vmem:[%s3] sm:$0xff]
    %v808 = vld [vmem:[%s3 + $0x8] sm:$0xff]
    %vm809 = vcmask 64512
    %v811 = vsel %vm809, %v389, 0
    %v814 = vsel %vm809, %v390, 0
    %v817 = vsel %vm809, %v391, 0
    %v820 = vsel %vm809, %v392, 0
    %v823 = vsel %vm809, %v393, 0
    %v826 = vsel %vm809, %v394, 0
    %v829 = vsel %vm809, %v395, 0
    %v832 = vsel %vm809, %v396, 0
    %v835 = vsel %vm809, %v397, 0
    %v838 = vsel %vm809, %v398, 0
    %v841 = vsel %vm809, %v399, 0
    %v844 = vsel %vm809, %v400, 0
    %v847 = vsel %vm809, %v401, 0
    %v850 = vsel %vm809, %v402, 0
    %v853 = vsel %vm809, %v403, 0
    %v856 = vsel %vm809, %v404, 0
    %858 = vmatpush.msra.mxu0 0.0
    %859 = vmatpush.msra.mxu0 0.0
    %860 = vmatpush.msra.mxu0 0.0
    %861 = vmatpush.msra.mxu0 0.0
    %862 = vmatpush.msra.mxu0 0.0
    %863 = vmatpush.msra.mxu0 0.0
    %864 = vmatpush.msra.mxu0 0.0
    %865 = vmatpush.msra.mxu0 0.0
    %866 = vmatpush.msra.mxu0 0.0
    %867 = vmatpush.msra.mxu0 0.0
    %868 = vmatpush.msra.mxu0 0.0
    %869 = vmatpush.msra.mxu0 0.0
    %870 = vmatpush.msra.mxu0 0.0
    %871 = vmatpush.msra.mxu0 0.0
    %872 = vmatpush.msra.mxu0 0.0
    %873 = vmatpush.msra.mxu0 %v807
    %874 = vmatmul.f32.gmra.mxu0 %v811
    %v875 = vpop.f32.mrf.mxu0
    %v876 = vadd.f32 0.0, %v875
    %877 = vmatmul.f32.gmra.mxu0 %v814
    %v878 = vpop.f32.mrf.mxu0
    %v879 = vadd.f32 0.0, %v878
    %880 = vmatmul.f32.gmra.mxu0 %v817
    %v881 = vpop.f32.mrf.mxu0
    %v882 = vadd.f32 0.0, %v881
    %883 = vmatmul.f32.gmra.mxu0 %v820
    %v884 = vpop.f32.mrf.mxu0
    %v885 = vadd.f32 0.0, %v884
    %886 = vmatmul.f32.gmra.mxu0 %v823
    %v887 = vpop.f32.mrf.mxu0
    %v888 = vadd.f32 0.0, %v887
    %889 = vmatmul.f32.gmra.mxu0 %v826
    %v890 = vpop.f32.mrf.mxu0
    %v891 = vadd.f32 0.0, %v890
    %892 = vmatmul.f32.gmra.mxu0 %v829
    %v893 = vpop.f32.mrf.mxu0
    %v894 = vadd.f32 0.0, %v893
    %895 = vmatmul.f32.gmra.mxu0 %v832
    %v896 = vpop.f32.mrf.mxu0
    %v897 = vadd.f32 0.0, %v896
    %898 = vmatmul.f32.gmra.mxu0 %v835
    %v899 = vpop.f32.mrf.mxu0
    %v900 = vadd.f32 0.0, %v899
    %901 = vmatmul.f32.gmra.mxu0 %v838
    %v902 = vpop.f32.mrf.mxu0
    %v903 = vadd.f32 0.0, %v902
    %904 = vmatmul.f32.gmra.mxu0 %v841
    %v905 = vpop.f32.mrf.mxu0
    %v906 = vadd.f32 0.0, %v905
    %907 = vmatmul.f32.gmra.mxu0 %v844
    %v908 = vpop.f32.mrf.mxu0
    %v909 = vadd.f32 0.0, %v908
    %910 = vmatmul.f32.gmra.mxu0 %v847
    %v911 = vpop.f32.mrf.mxu0
    %v912 = vadd.f32 0.0, %v911
    %913 = vmatmul.f32.gmra.mxu0 %v850
    %v914 = vpop.f32.mrf.mxu0
    %v915 = vadd.f32 0.0, %v914
    %916 = vmatmul.f32.gmra.mxu0 %v853
    %v917 = vpop.f32.mrf.mxu0
    %v918 = vadd.f32 0.0, %v917
    %919 = vmatmul.f32.gmra.mxu0 %v856
    %v920 = vpop.f32.mrf.mxu0
    %v921 = vadd.f32 0.0, %v920
    %922 = vdwg.mxu0
    %923 = vmatpush.msra.mxu0 0.0
    %924 = vmatpush.msra.mxu0 0.0
    %925 = vmatpush.msra.mxu0 0.0
    %926 = vmatpush.msra.mxu0 0.0
    %927 = vmatpush.msra.mxu0 0.0
    %928 = vmatpush.msra.mxu0 0.0
    %929 = vmatpush.msra.mxu0 0.0
    %930 = vmatpush.msra.mxu0 0.0
    %931 = vmatpush.msra.mxu0 0.0
    %932 = vmatpush.msra.mxu0 0.0
    %933 = vmatpush.msra.mxu0 0.0
    %934 = vmatpush.msra.mxu0 0.0
    %935 = vmatpush.msra.mxu0 0.0
    %936 = vmatpush.msra.mxu0 0.0
    %937 = vmatpush.msra.mxu0 0.0
    %938 = vmatpush.msra.mxu0 %v808
    %939 = vmatmul.f32.gmra.mxu0 %v811
    %v940 = vpop.f32.mrf.mxu0
    %v941 = vadd.f32 0.0, %v940
    %942 = vmatmul.f32.gmra.mxu0 %v814
    %v943 = vpop.f32.mrf.mxu0
    %v944 = vadd.f32 0.0, %v943
    %945 = vmatmul.f32.gmra.mxu0 %v817
    %v946 = vpop.f32.mrf.mxu0
    %v947 = vadd.f32 0.0, %v946
    %948 = vmatmul.f32.gmra.mxu0 %v820
    %v949 = vpop.f32.mrf.mxu0
    %v950 = vadd.f32 0.0, %v949
    %951 = vmatmul.f32.gmra.mxu0 %v823
    %v952 = vpop.f32.mrf.mxu0
    %v953 = vadd.f32 0.0, %v952
    %954 = vmatmul.f32.gmra.mxu0 %v826
    %v955 = vpop.f32.mrf.mxu0
    %v956 = vadd.f32 0.0, %v955
    %957 = vmatmul.f32.gmra.mxu0 %v829
    %v958 = vpop.f32.mrf.mxu0
    %v959 = vadd.f32 0.0, %v958
    %960 = vmatmul.f32.gmra.mxu0 %v832
    %v961 = vpop.f32.mrf.mxu0
    %v962 = vadd.f32 0.0, %v961
    %963 = vmatmul.f32.gmra.mxu0 %v835
    %v964 = vpop.f32.mrf.mxu0
    %v965 = vadd.f32 0.0, %v964
    %966 = vmatmul.f32.gmra.mxu0 %v838
    %v967 = vpop.f32.mrf.mxu0
    %v968 = vadd.f32 0.0, %v967
    %969 = vmatmul.f32.gmra.mxu0 %v841
    %v970 = vpop.f32.mrf.mxu0
    %v971 = vadd.f32 0.0, %v970
    %972 = vmatmul.f32.gmra.mxu0 %v844
    %v973 = vpop.f32.mrf.mxu0
    %v974 = vadd.f32 0.0, %v973
    %975 = vmatmul.f32.gmra.mxu0 %v847
    %v976 = vpop.f32.mrf.mxu0
    %v977 = vadd.f32 0.0, %v976
    %978 = vmatmul.f32.gmra.mxu0 %v850
    %v979 = vpop.f32.mrf.mxu0
    %v980 = vadd.f32 0.0, %v979
    %981 = vmatmul.f32.gmra.mxu0 %v853
    %v982 = vpop.f32.mrf.mxu0
    %v983 = vadd.f32 0.0, %v982
    %984 = vmatmul.f32.gmra.mxu0 %v856
    %v985 = vpop.f32.mrf.mxu0
    %v986 = vadd.f32 0.0, %v985
    %987 = vdwg.mxu0
    %v989 = vsel %vm809, %v656, 0
    %v992 = vsel %vm809, %v666, 0
    %v995 = vsel %vm809, %v676, 0
    %v998 = vsel %vm809, %v686, 0
    %v1001 = vsel %vm809, %v696, 0
    %v1004 = vsel %vm809, %v706, 0
    %v1007 = vsel %vm809, %v716, 0
    %v1010 = vsel %vm809, %v726, 0
    %v1013 = vsel %vm809, %v736, 0
    %v1016 = vsel %vm809, %v746, 0
    %v1019 = vsel %vm809, %v756, 0
    %v1022 = vsel %vm809, %v766, 0
    %v1025 = vsel %vm809, %v776, 0
    %v1028 = vsel %vm809, %v786, 0
    %v1031 = vsel %vm809, %v796, 0
    %v1034 = vsel %vm809, %v806, 0
    %1036 = vmatpush.msra.mxu0 0.0
    %1037 = vmatpush.msra.mxu0 0.0
    %1038 = vmatpush.msra.mxu0 0.0
    %1039 = vmatpush.msra.mxu0 0.0
    %1040 = vmatpush.msra.mxu0 0.0
    %1041 = vmatpush.msra.mxu0 0.0
    %1042 = vmatpush.msra.mxu0 0.0
    %1043 = vmatpush.msra.mxu0 0.0
    %1044 = vmatpush.msra.mxu0 0.0
    %1045 = vmatpush.msra.mxu0 0.0
    %1046 = vmatpush.msra.mxu0 0.0
    %1047 = vmatpush.msra.mxu0 0.0
    %1048 = vmatpush.msra.mxu0 0.0
    %1049 = vmatpush.msra.mxu0 0.0
    %1050 = vmatpush.msra.mxu0 0.0
    %1051 = vmatpush.msra.mxu0 %v807
    %1052 = vmatmul.f32.gmra.mxu0 %v989
    %v1053 = vpop.f32.mrf.mxu0
    %v1054 = vadd.f32 0.0, %v1053
    %1055 = vmatmul.f32.gmra.mxu0 %v992
    %v1056 = vpop.f32.mrf.mxu0
    %v1057 = vadd.f32 0.0, %v1056
    %1058 = vmatmul.f32.gmra.mxu0 %v995
    %v1059 = vpop.f32.mrf.mxu0
    %v1060 = vadd.f32 0.0, %v1059
    %1061 = vmatmul.f32.gmra.mxu0 %v998
    %v1062 = vpop.f32.mrf.mxu0
    %v1063 = vadd.f32 0.0, %v1062
    %1064 = vmatmul.f32.gmra.mxu0 %v1001
    %v1065 = vpop.f32.mrf.mxu0
    %v1066 = vadd.f32 0.0, %v1065
    %1067 = vmatmul.f32.gmra.mxu0 %v1004
    %v1068 = vpop.f32.mrf.mxu0
    %v1069 = vadd.f32 0.0, %v1068
    %1070 = vmatmul.f32.gmra.mxu0 %v1007
    %v1071 = vpop.f32.mrf.mxu0
    %v1072 = vadd.f32 0.0, %v1071
    %1073 = vmatmul.f32.gmra.mxu0 %v1010
    %v1074 = vpop.f32.mrf.mxu0
    %v1075 = vadd.f32 0.0, %v1074
    %1076 = vmatmul.f32.gmra.mxu0 %v1013
    %v1077 = vpop.f32.mrf.mxu0
    %v1078 = vadd.f32 0.0, %v1077
    %1079 = vmatmul.f32.gmra.mxu0 %v1016
    %v1080 = vpop.f32.mrf.mxu0
    %v1081 = vadd.f32 0.0, %v1080
    %1082 = vmatmul.f32.gmra.mxu0 %v1019
    %v1083 = vpop.f32.mrf.mxu0
    %v1084 = vadd.f32 0.0, %v1083
    %1085 = vmatmul.f32.gmra.mxu0 %v1022
    %v1086 = vpop.f32.mrf.mxu0
    %v1087 = vadd.f32 0.0, %v1086
    %1088 = vmatmul.f32.gmra.mxu0 %v1025
    %v1089 = vpop.f32.mrf.mxu0
    %v1090 = vadd.f32 0.0, %v1089
    %1091 = vmatmul.f32.gmra.mxu0 %v1028
    %v1092 = vpop.f32.mrf.mxu0
    %v1093 = vadd.f32 0.0, %v1092
    %1094 = vmatmul.f32.gmra.mxu0 %v1031
    %v1095 = vpop.f32.mrf.mxu0
    %v1096 = vadd.f32 0.0, %v1095
    %1097 = vmatmul.f32.gmra.mxu0 %v1034
    %v1098 = vpop.f32.mrf.mxu0
    %v1099 = vadd.f32 0.0, %v1098
    %1100 = vdwg.mxu0
    %1101 = vmatpush.msra.mxu0 0.0
    %1102 = vmatpush.msra.mxu0 0.0
    %1103 = vmatpush.msra.mxu0 0.0
    %1104 = vmatpush.msra.mxu0 0.0
    %1105 = vmatpush.msra.mxu0 0.0
    %1106 = vmatpush.msra.mxu0 0.0
    %1107 = vmatpush.msra.mxu0 0.0
    %1108 = vmatpush.msra.mxu0 0.0
    %1109 = vmatpush.msra.mxu0 0.0
    %1110 = vmatpush.msra.mxu0 0.0
    %1111 = vmatpush.msra.mxu0 0.0
    %1112 = vmatpush.msra.mxu0 0.0
    %1113 = vmatpush.msra.mxu0 0.0
    %1114 = vmatpush.msra.mxu0 0.0
    %1115 = vmatpush.msra.mxu0 0.0
    %1116 = vmatpush.msra.mxu0 %v808
    %1117 = vmatmul.f32.gmra.mxu0 %v989
    %v1118 = vpop.f32.mrf.mxu0
    %v1119 = vadd.f32 0.0, %v1118
    %1120 = vmatmul.f32.gmra.mxu0 %v992
    %v1121 = vpop.f32.mrf.mxu0
    %v1122 = vadd.f32 0.0, %v1121
    %1123 = vmatmul.f32.gmra.mxu0 %v995
    %v1124 = vpop.f32.mrf.mxu0
    %v1125 = vadd.f32 0.0, %v1124
    %1126 = vmatmul.f32.gmra.mxu0 %v998
    %v1127 = vpop.f32.mrf.mxu0
    %v1128 = vadd.f32 0.0, %v1127
    %1129 = vmatmul.f32.gmra.mxu0 %v1001
    %v1130 = vpop.f32.mrf.mxu0
    %v1131 = vadd.f32 0.0, %v1130
    %1132 = vmatmul.f32.gmra.mxu0 %v1004
    %v1133 = vpop.f32.mrf.mxu0
    %v1134 = vadd.f32 0.0, %v1133
    %1135 = vmatmul.f32.gmra.mxu0 %v1007
    %v1136 = vpop.f32.mrf.mxu0
    %v1137 = vadd.f32 0.0, %v1136
    %1138 = vmatmul.f32.gmra.mxu0 %v1010
    %v1139 = vpop.f32.mrf.mxu0
    %v1140 = vadd.f32 0.0, %v1139
    %1141 = vmatmul.f32.gmra.mxu0 %v1013
    %v1142 = vpop.f32.mrf.mxu0
    %v1143 = vadd.f32 0.0, %v1142
    %1144 = vmatmul.f32.gmra.mxu0 %v1016
    %v1145 = vpop.f32.mrf.mxu0
    %v1146 = vadd.f32 0.0, %v1145
    %1147 = vmatmul.f32.gmra.mxu0 %v1019
    %v1148 = vpop.f32.mrf.mxu0
    %v1149 = vadd.f32 0.0, %v1148
    %1150 = vmatmul.f32.gmra.mxu0 %v1022
    %v1151 = vpop.f32.mrf.mxu0
    %v1152 = vadd.f32 0.0, %v1151
    %1153 = vmatmul.f32.gmra.mxu0 %v1025
    %v1154 = vpop.f32.mrf.mxu0
    %v1155 = vadd.f32 0.0, %v1154
    %1156 = vmatmul.f32.gmra.mxu0 %v1028
    %v1157 = vpop.f32.mrf.mxu0
    %v1158 = vadd.f32 0.0, %v1157
    %1159 = vmatmul.f32.gmra.mxu0 %v1031
    %v1160 = vpop.f32.mrf.mxu0
    %v1161 = vadd.f32 0.0, %v1160
    %1162 = vmatmul.f32.gmra.mxu0 %v1034
    %v1163 = vpop.f32.mrf.mxu0
    %v1164 = vadd.f32 0.0, %v1163
    %1165 = vdwg.mxu0
    %v1166 = vsub.f32 %v115, %v876
    %v1167 = vsub.f32 %v180, %v941
    %v1168 = vsub.f32 %v118, %v879
    %v1169 = vsub.f32 %v183, %v944
    %v1170 = vsub.f32 %v121, %v882
    %v1171 = vsub.f32 %v186, %v947
    %v1172 = vsub.f32 %v124, %v885
    %v1173 = vsub.f32 %v189, %v950
    %v1174 = vsub.f32 %v127, %v888
    %v1175 = vsub.f32 %v192, %v953
    %v1176 = vsub.f32 %v130, %v891
    %v1177 = vsub.f32 %v195, %v956
    %v1178 = vsub.f32 %v133, %v894
    %v1179 = vsub.f32 %v198, %v959
    %v1180 = vsub.f32 %v136, %v897
    %v1181 = vsub.f32 %v201, %v962
    %v1182 = vsub.f32 %v139, %v900
    %v1183 = vsub.f32 %v204, %v965
    %v1184 = vsub.f32 %v142, %v903
    %v1185 = vsub.f32 %v207, %v968
    %v1186 = vsub.f32 %v145, %v906
    %v1187 = vsub.f32 %v210, %v971
    %v1188 = vsub.f32 %v148, %v909
    %v1189 = vsub.f32 %v213, %v974
    %v1190 = vsub.f32 %v151, %v912
    %v1191 = vsub.f32 %v216, %v977
    %v1192 = vsub.f32 %v154, %v915
    %v1193 = vsub.f32 %v219, %v980
    %v1194 = vsub.f32 %v157, %v918
    %v1195 = vsub.f32 %v222, %v983
    %v1196 = vsub.f32 %v160, %v921
    %v1197 = vsub.f32 %v225, %v986
    %v1198 = vmul.f32 %v1166, %v1054
    %v1199 = vmul.f32 %v1167, %v1119
    %v1200 = vmul.f32 %v1168, %v1057
    %v1201 = vmul.f32 %v1169, %v1122
    %v1202 = vmul.f32 %v1170, %v1060
    %v1203 = vmul.f32 %v1171, %v1125
    %v1204 = vmul.f32 %v1172, %v1063
    %v1205 = vmul.f32 %v1173, %v1128
    %v1206 = vmul.f32 %v1174, %v1066
    %v1207 = vmul.f32 %v1175, %v1131
    %v1208 = vmul.f32 %v1176, %v1069
    %v1209 = vmul.f32 %v1177, %v1134
    %v1210 = vmul.f32 %v1178, %v1072
    %v1211 = vmul.f32 %v1179, %v1137
    %v1212 = vmul.f32 %v1180, %v1075
    %v1213 = vmul.f32 %v1181, %v1140
    %v1214 = vmul.f32 %v1182, %v1078
    %v1215 = vmul.f32 %v1183, %v1143
    %v1216 = vmul.f32 %v1184, %v1081
    %v1217 = vmul.f32 %v1185, %v1146
    %v1218 = vmul.f32 %v1186, %v1084
    %v1219 = vmul.f32 %v1187, %v1149
    %v1220 = vmul.f32 %v1188, %v1087
    %v1221 = vmul.f32 %v1189, %v1152
    %v1222 = vmul.f32 %v1190, %v1090
    %v1223 = vmul.f32 %v1191, %v1155
    %v1224 = vmul.f32 %v1192, %v1093
    %v1225 = vmul.f32 %v1193, %v1158
    %v1226 = vmul.f32 %v1194, %v1096
    %v1227 = vmul.f32 %v1195, %v1161
    %v1228 = vmul.f32 %v1196, %v1099
    %v1229 = vmul.f32 %v1197, %v1164
    %v1230 = vld [vmem:[%s4] sm:$0x3]
    %v1232 = vperm.slane %v1230, 0
    %v1233 = vperm.slane %v1230, 1
    %v1236 = vmul.f32 %v1198, %v1232
    %v1237 = vmul.f32 %v1199, %v1233
    %v1238 = vmul.f32 %v1200, %v1232
    %v1239 = vmul.f32 %v1201, %v1233
    %v1240 = vmul.f32 %v1202, %v1232
    %v1241 = vmul.f32 %v1203, %v1233
    %v1242 = vmul.f32 %v1204, %v1232
    %v1243 = vmul.f32 %v1205, %v1233
    %v1244 = vmul.f32 %v1206, %v1232
    %v1245 = vmul.f32 %v1207, %v1233
    %v1246 = vmul.f32 %v1208, %v1232
    %v1247 = vmul.f32 %v1209, %v1233
    %v1248 = vmul.f32 %v1210, %v1232
    %v1249 = vmul.f32 %v1211, %v1233
    %v1250 = vmul.f32 %v1212, %v1232
    %v1251 = vmul.f32 %v1213, %v1233
    %v1252 = vmul.f32 %v1214, %v1232
    %v1253 = vmul.f32 %v1215, %v1233
    %v1254 = vmul.f32 %v1216, %v1232
    %v1255 = vmul.f32 %v1217, %v1233
    %v1256 = vmul.f32 %v1218, %v1232
    %v1257 = vmul.f32 %v1219, %v1233
    %v1258 = vmul.f32 %v1220, %v1232
    %v1259 = vmul.f32 %v1221, %v1233
    %v1260 = vmul.f32 %v1222, %v1232
    %v1261 = vmul.f32 %v1223, %v1233
    %v1262 = vmul.f32 %v1224, %v1232
    %v1263 = vmul.f32 %v1225, %v1233
    %v1264 = vmul.f32 %v1226, %v1232
    %v1265 = vmul.f32 %v1227, %v1233
    %v1266 = vmul.f32 %v1228, %v1232
    %v1267 = vmul.f32 %v1229, %v1233
    %v1268 = vld [vmem:[%s5] sm:$0x3]
    %v1270 = vperm.slane %v1268, 0
    %v1271 = vperm.slane %v1268, 1
    %v1274 = vadd.f32 %v1236, %v1270
    %v1275 = vadd.f32 %v1237, %v1271
    %v1276 = vadd.f32 %v1238, %v1270
    %v1277 = vadd.f32 %v1239, %v1271
    %v1278 = vadd.f32 %v1240, %v1270
    %v1279 = vadd.f32 %v1241, %v1271
    %v1280 = vadd.f32 %v1242, %v1270
    %v1281 = vadd.f32 %v1243, %v1271
    %v1282 = vadd.f32 %v1244, %v1270
    %v1283 = vadd.f32 %v1245, %v1271
    %v1284 = vadd.f32 %v1246, %v1270
    %v1285 = vadd.f32 %v1247, %v1271
    %v1286 = vadd.f32 %v1248, %v1270
    %v1287 = vadd.f32 %v1249, %v1271
    %v1288 = vadd.f32 %v1250, %v1270
    %v1289 = vadd.f32 %v1251, %v1271
    %v1290 = vadd.f32 %v1252, %v1270
    %v1291 = vadd.f32 %v1253, %v1271
    %v1292 = vadd.f32 %v1254, %v1270
    %v1293 = vadd.f32 %v1255, %v1271
    %v1294 = vadd.f32 %v1256, %v1270
    %v1295 = vadd.f32 %v1257, %v1271
    %v1296 = vadd.f32 %v1258, %v1270
    %v1297 = vadd.f32 %v1259, %v1271
    %v1298 = vadd.f32 %v1260, %v1270
    %v1299 = vadd.f32 %v1261, %v1271
    %v1300 = vadd.f32 %v1262, %v1270
    %v1301 = vadd.f32 %v1263, %v1271
    %v1302 = vadd.f32 %v1264, %v1270
    %v1303 = vadd.f32 %v1265, %v1271
    %v1304 = vadd.f32 %v1266, %v1270
    %v1305 = vadd.f32 %v1267, %v1271
    %1306 = vst [vmem:[#allocation2] sm:$0xff] %v1274
    %1307 = vst [vmem:[#allocation2 + $0x8] sm:$0xff] %v1275
    %1308 = vst [vmem:[#allocation2 + $0x10] sm:$0xff] %v1276
    %1309 = vst [vmem:[#allocation2 + $0x18] sm:$0xff] %v1277
    %1310 = vst [vmem:[#allocation2 + $0x20] sm:$0xff] %v1278
    %1311 = vst [vmem:[#allocation2 + $0x28] sm:$0xff] %v1279
    %1312 = vst [vmem:[#allocation2 + $0x30] sm:$0xff] %v1280
    %1313 = vst [vmem:[#allocation2 + $0x38] sm:$0xff] %v1281
    %1314 = vst [vmem:[#allocation2 + $0x40] sm:$0xff] %v1282
    %1315 = vst [vmem:[#allocation2 + $0x48] sm:$0xff] %v1283
    %1316 = vst [vmem:[#allocation2 + $0x50] sm:$0xff] %v1284
    %1317 = vst [vmem:[#allocation2 + $0x58] sm:$0xff] %v1285
    %1318 = vst [vmem:[#allocation2 + $0x60] sm:$0xff] %v1286
    %1319 = vst [vmem:[#allocation2 + $0x68] sm:$0xff] %v1287
    %1320 = vst [vmem:[#allocation2 + $0x70] sm:$0xff] %v1288
    %1321 = vst [vmem:[#allocation2 + $0x78] sm:$0xff] %v1289
    %1322 = vst [vmem:[#allocation2 + $0x80] sm:$0xff] %v1290
    %1323 = vst [vmem:[#allocation2 + $0x88] sm:$0xff] %v1291
    %1324 = vst [vmem:[#allocation2 + $0x90] sm:$0xff] %v1292
    %1325 = vst [vmem:[#allocation2 + $0x98] sm:$0xff] %v1293
    %1326 = vst [vmem:[#allocation2 + $0xa0] sm:$0xff] %v1294
    %1327 = vst [vmem:[#allocation2 + $0xa8] sm:$0xff] %v1295
    %1328 = vst [vmem:[#allocation2 + $0xb0] sm:$0xff] %v1296
    %1329 = vst [vmem:[#allocation2 + $0xb8] sm:$0xff] %v1297
    %1330 = vst [vmem:[#allocation2 + $0xc0] sm:$0xff] %v1298
    %1331 = vst [vmem:[#allocation2 + $0xc8] sm:$0xff] %v1299
    %1332 = vst [vmem:[#allocation2 + $0xd0] sm:$0xff] %v1300
    %1333 = vst [vmem:[#allocation2 + $0xd8] sm:$0xff] %v1301
    %1334 = vst [vmem:[#allocation2 + $0xe0] sm:$0xff] %v1302
    %1335 = vst [vmem:[#allocation2 + $0xe8] sm:$0xff] %v1303
    %1336 = vst [vmem:[#allocation2 + $0xf0] sm:$0xff] %v1304
    %1337 = vst [vmem:[#allocation2 + $0xf8] sm:$0xff] %v1305
    // Predicated region
    $region26: #{tpu_custom_call.1} parent=1 // pred_check
      _
    $region27: #{tpu_custom_call.1} parent=1 // pred_check_branch
      %1339 = sbr.rel (0) target = $region29
    $region28: #{tpu_custom_call.1} parent=1 // pred_region
      %1341 = vsyncadd [#allocation3], 0
      %s1342 = sshll.u32 [#allocation2], 4
      %s1343 = int_to_ptr.vmem [resolvable:$true] %s1342
      %s1344 = sshll.u32 %s6, 4
      %s1345 = int_to_ptr.hbm [resolvable:$true] %s1344
      %1350 = dma.vmem_to_hbm [thread:$0]  %s1343, 4096, %s1345, [#allocation3], 256, 256, 16
    $region29: #{tpu_custom_call.1} parent=1 // pred_fallthru
      _
    // Predicated region
    $region30: #{tpu_custom_call.1} parent=1 // pred_check
      _
    $region31: #{tpu_custom_call.1} parent=1 // pred_check_branch
      %1352 = sbr.rel (0) target = $region33
    $region32: #{tpu_custom_call.1} parent=1 // pred_region
      %1354 = dma.done [#allocation3], 4096
    $region33: #{tpu_custom_call.1} parent=1 // pred_fallthru
      _
    %1355 = vsyncpa [#allocation3], 1

</llo_original>
